<compile_context>
chip_gen: v7x
topology: tpu7x:2x2x1
jax: 0.10.0
libtpu: 0.0.40
codegen_flags: <defaults>
</compile_context>

<pallas_src>
import functools
import math

import jax
import jax.numpy as jnp
from jax import lax
from jax.experimental import pallas as pl
from jax.experimental.pallas import tpu as pltpu


def _self_attention_kernel(x_ref, wq_ref, wk_ref, wv_ref,
                           bq_ref, bk_ref, bv_ref, mask_ref, o_ref,
                           *, num_heads, head_dim, scale):
    # x_ref:    (1, S, H) block for the current batch element
    # w*_ref:   (H, H) pre-transposed weights (out = x @ Wt + b)
    # b*_ref:   (1, H)
    # mask_ref: (1, 1, S) additive attention mask for this batch element
    # o_ref:    (1, S, H)
    x = x_ref[0]                      # [S, H]
    mask = mask_ref[0]                # [1, S], broadcasts over heads & query rows

    # Full-width QKV projections: single big MXU matmuls (better utilization than
    # per-head dH-wide matmuls), f32 accumulation.
    q = jnp.dot(x, wq_ref[...], preferred_element_type=jnp.float32) + bq_ref[...]
    k = jnp.dot(x, wk_ref[...], preferred_element_type=jnp.float32) + bk_ref[...]
    v = jnp.dot(x, wv_ref[...], preferred_element_type=jnp.float32) + bv_ref[...]

    # num_heads is a static Python int -> this loop fully unrolls at trace time.
    heads = []
    for h in range(num_heads):
        sl = slice(h * head_dim, (h + 1) * head_dim)
        q_h = q[:, sl]                # [S, dH]
        k_h = k[:, sl]                # [S, dH]
        v_h = v[:, sl]                # [S, dH]

        # scores = Q_h @ K_h^T via dot_general dimension numbers (no transpose).
        s = lax.dot_general(q_h, k_h,
                            dimension_numbers=(((1,), (1,)), ((), ())),
                            preferred_element_type=jnp.float32)      # [S, S]
        s = s * scale + mask

        # Numerically stable softmax over the key axis.
        s = s - jnp.max(s, axis=-1, keepdims=True)
        p = jnp.exp(s)
        p = p / jnp.sum(p, axis=-1, keepdims=True)

        ctx_h = jnp.dot(p, v_h, preferred_element_type=jnp.float32)  # [S, dH]
        heads.append(ctx_h)

    # Concatenate heads -> one lane-dense [S, H] store (== permute(0,2,1,3)+view).
    o_ref[0] = jnp.concatenate(heads, axis=-1).astype(o_ref.dtype)


def bert_self_attention(hidden_states, attention_mask,
                        wq, bq, wk, bk, wv, bv, num_attention_heads):
    """hidden_states: [B, S, H]; attention_mask: additive, [B, 1, 1, S];
    w*: [H, H] (PyTorch nn.Linear convention), b*: [H]. Returns [B, S, H]."""
    B, S, H = hidden_states.shape
    assert H % num_attention_heads == 0
    head_dim = H // num_attention_heads
    scale = 1.0 / math.sqrt(head_dim)

    # Hoist the weight transposes out of the kernel (static params; XLA folds them).
    wq_t, wk_t, wv_t = wq.T, wk.T, wv.T
    bq2 = bq.reshape(1, H)
    bk2 = bk.reshape(1, H)
    bv2 = bv.reshape(1, H)
    mask = attention_mask.reshape(B, 1, S).astype(jnp.float32)

    kernel = functools.partial(_self_attention_kernel,
                               num_heads=num_attention_heads,
                               head_dim=head_dim,
                               scale=scale)

    grid_spec = pl.GridSpec(
        grid=(B,),
        in_specs=[
            pl.BlockSpec((1, S, H), lambda b: (b, 0, 0)),   # x (per batch)
            pl.BlockSpec((H, H), lambda b: (0, 0)),          # Wq^T (VMEM-resident)
            pl.BlockSpec((H, H), lambda b: (0, 0)),          # Wk^T
            pl.BlockSpec((H, H), lambda b: (0, 0)),          # Wv^T
            pl.BlockSpec((1, H), lambda b: (0, 0)),           # bq
            pl.BlockSpec((1, H), lambda b: (0, 0)),           # bk
            pl.BlockSpec((1, H), lambda b: (0, 0)),           # bv
            pl.BlockSpec((1, 1, S), lambda b: (b, 0, 0)),     # mask (per batch)
        ],
        out_specs=pl.BlockSpec((1, S, H), lambda b: (b, 0, 0)),
    )

    out = pl.pallas_call(
        kernel,
        out_shape=jax.ShapeDtypeStruct((B, S, H), hidden_states.dtype),
        grid_spec=grid_spec,
        compiler_params=pltpu.CompilerParams(
            dimension_semantics=("parallel",),      # batch axis -> both TCs on v7x
            vmem_limit_bytes=32 * 1024 * 1024,       # explicit budget (review item)
        ),
    )(hidden_states, wq_t, wk_t, wv_t, bq2, bk2, bv2, mask)
    return out


def _reference(hidden_states, attention_mask, wq, bq, wk, bk, wv, bv, num_heads):
    B, S, H = hidden_states.shape
    dH = H // num_heads
    hp = jax.lax.Precision.HIGHEST

    def proj(w, b):
        y = jnp.einsum('bsh,oh->bso', hidden_states, w, precision=hp) + b
        return y.reshape(B, S, num_heads, dH).transpose(0, 2, 1, 3)

    q, k, v = proj(wq, bq), proj(wk, bk), proj(wv, bv)
    scores = jnp.einsum('bhqd,bhkd->bhqk', q, k, precision=hp) / math.sqrt(dH)
    scores = scores + attention_mask
    probs = jax.nn.softmax(scores, axis=-1)
    ctx = jnp.einsum('bhqk,bhkd->bhqd', probs, v, precision=hp)
    return ctx.transpose(0, 2, 1, 3).reshape(B, S, H)


if __name__ == "__main__":
    key = jax.random.PRNGKey(0)
    B, S, H, NH = 2, 8, 32, 4   # batch, seq, hidden, attention heads (head_dim=8)

    keys = jax.random.split(key, 7)
    hidden_states = jax.random.normal(keys[0], (B, S, H), dtype=jnp.float32)
    bound = 1.0 / math.sqrt(H)
    wq = jax.random.uniform(keys[1], (H, H), minval=-bound, maxval=bound, dtype=jnp.float32)
    wk = jax.random.uniform(keys[2], (H, H), minval=-bound, maxval=bound, dtype=jnp.float32)
    wv = jax.random.uniform(keys[3], (H, H), minval=-bound, maxval=bound, dtype=jnp.float32)
    bq = jax.random.uniform(keys[4], (H,), minval=-bound, maxval=bound, dtype=jnp.float32)
    bk = jax.random.uniform(keys[5], (H,), minval=-bound, maxval=bound, dtype=jnp.float32)
    bv = jax.random.uniform(keys[6], (H,), minval=-bound, maxval=bound, dtype=jnp.float32)

    # Standard HF-style additive mask [B, 1, 1, S]; mask out the last 2 keys of batch 1.
    attention_mask = jnp.zeros((B, 1, 1, S), dtype=jnp.float32)
    attention_mask = attention_mask.at[1, :, :, S - 2:].set(-1e9)

    out = bert_self_attention(hidden_states, attention_mask,
                              wq, bq, wk, bk, wv, bv, NH)
    out = jax.block_until_ready(out)

    ref = _reference(hidden_states, attention_mask, wq, bq, wk, bk, wv, bv, NH)
    assert out.shape == (B, S, H)
    assert jnp.allclose(out, ref, atol=1e-3, rtol=1e-3)

    print("KERNEL_OK")
</pallas_src>

<mosaic_0001>
module attributes {stable_mosaic.version = 11 : i64} {
  func.func @_self_attention_kernel(%arg0: i32, %arg1: memref<1x8x32xf32, #tpu.memory_space<vmem>>, %arg2: memref<32x32xf32, #tpu.memory_space<vmem>>, %arg3: memref<32x32xf32, #tpu.memory_space<vmem>>, %arg4: memref<32x32xf32, #tpu.memory_space<vmem>>, %arg5: memref<1x32xf32, #tpu.memory_space<vmem>>, %arg6: memref<1x32xf32, #tpu.memory_space<vmem>>, %arg7: memref<1x32xf32, #tpu.memory_space<vmem>>, %arg8: memref<1x1x8xf32, #tpu.memory_space<vmem>>, %arg9: memref<1x8x32xf32, #tpu.memory_space<vmem>>) attributes {dimension_semantics = [#tpu.dimension_semantics<parallel>], iteration_bounds = array<i64: 2>, scalar_prefetch = 0 : i64, scratch_operands = 0 : i64, tpu.core_type = #tpu.core_type<tc>, window_params = [{transform_indices = @transform_0, window_bounds = array<i64: 1, 8, 32>}, {pipeline_mode = #tpu.pipeline_mode<synchronous>, transform_indices = @transform_1, window_bounds = array<i64: 32, 32>}, {pipeline_mode = #tpu.pipeline_mode<synchronous>, transform_indices = @transform_2, window_bounds = array<i64: 32, 32>}, {pipeline_mode = #tpu.pipeline_mode<synchronous>, transform_indices = @transform_3, window_bounds = array<i64: 32, 32>}, {pipeline_mode = #tpu.pipeline_mode<synchronous>, transform_indices = @transform_4, window_bounds = array<i64: 1, 32>}, {pipeline_mode = #tpu.pipeline_mode<synchronous>, transform_indices = @transform_5, window_bounds = array<i64: 1, 32>}, {pipeline_mode = #tpu.pipeline_mode<synchronous>, transform_indices = @transform_6, window_bounds = array<i64: 1, 32>}, {transform_indices = @transform_7, window_bounds = array<i64: 1, 1, 8>}, {transform_indices = @transform_8, window_bounds = array<i64: 1, 8, 32>}]} {
    %c0 = arith.constant 0 : index
    %c0_0 = arith.constant 0 : index
    %c0_1 = arith.constant 0 : index
    %0 = vector.load %arg1[%c0, %c0_0, %c0_1] : memref<1x8x32xf32, #tpu.memory_space<vmem>>, vector<1x8x32xf32>
    %1 = vector.shape_cast %0 : vector<1x8x32xf32> to vector<8x32xf32>
    %c0_2 = arith.constant 0 : index
    %c0_3 = arith.constant 0 : index
    %c0_4 = arith.constant 0 : index
    %2 = vector.load %arg8[%c0_2, %c0_3, %c0_4] : memref<1x1x8xf32, #tpu.memory_space<vmem>>, vector<1x1x8xf32>
    %3 = vector.shape_cast %2 : vector<1x1x8xf32> to vector<1x8xf32>
    %c0_5 = arith.constant 0 : index
    %c0_6 = arith.constant 0 : index
    %4 = vector.load %arg2[%c0_5, %c0_6] : memref<32x32xf32, #tpu.memory_space<vmem>>, vector<32x32xf32>
    %cst = arith.constant dense<0.000000e+00> : vector<8x32xf32>
    %5 = tpu.matmul %1, %4, %cst {dimension_numbers = #tpu.dot_dimension_numbers<[1], [0], [0], [1], [0, 0, 1, 1], [], []>} : vector<8x32xf32>, vector<32x32xf32>, vector<8x32xf32> -> vector<8x32xf32>
    %c0_7 = arith.constant 0 : index
    %c0_8 = arith.constant 0 : index
    %6 = vector.load %arg5[%c0_7, %c0_8] : memref<1x32xf32, #tpu.memory_space<vmem>>, vector<1x32xf32>
    %7 = vector.broadcast %6 : vector<1x32xf32> to vector<8x32xf32>
    %8 = arith.addf %5, %7 : vector<8x32xf32>
    %c0_9 = arith.constant 0 : index
    %c0_10 = arith.constant 0 : index
    %9 = vector.load %arg3[%c0_9, %c0_10] : memref<32x32xf32, #tpu.memory_space<vmem>>, vector<32x32xf32>
    %cst_11 = arith.constant dense<0.000000e+00> : vector<8x32xf32>
    %10 = tpu.matmul %1, %9, %cst_11 {dimension_numbers = #tpu.dot_dimension_numbers<[1], [0], [0], [1], [0, 0, 1, 1], [], []>} : vector<8x32xf32>, vector<32x32xf32>, vector<8x32xf32> -> vector<8x32xf32>
    %c0_12 = arith.constant 0 : index
    %c0_13 = arith.constant 0 : index
    %11 = vector.load %arg6[%c0_12, %c0_13] : memref<1x32xf32, #tpu.memory_space<vmem>>, vector<1x32xf32>
    %12 = vector.broadcast %11 : vector<1x32xf32> to vector<8x32xf32>
    %13 = arith.addf %10, %12 : vector<8x32xf32>
    %c0_14 = arith.constant 0 : index
    %c0_15 = arith.constant 0 : index
    %14 = vector.load %arg4[%c0_14, %c0_15] : memref<32x32xf32, #tpu.memory_space<vmem>>, vector<32x32xf32>
    %cst_16 = arith.constant dense<0.000000e+00> : vector<8x32xf32>
    %15 = tpu.matmul %1, %14, %cst_16 {dimension_numbers = #tpu.dot_dimension_numbers<[1], [0], [0], [1], [0, 0, 1, 1], [], []>} : vector<8x32xf32>, vector<32x32xf32>, vector<8x32xf32> -> vector<8x32xf32>
    %c0_17 = arith.constant 0 : index
    %c0_18 = arith.constant 0 : index
    %16 = vector.load %arg7[%c0_17, %c0_18] : memref<1x32xf32, #tpu.memory_space<vmem>>, vector<1x32xf32>
    %17 = vector.broadcast %16 : vector<1x32xf32> to vector<8x32xf32>
    %18 = arith.addf %15, %17 : vector<8x32xf32>
    %19 = vector.extract_strided_slice %8 {offsets = [0, 0], sizes = [8, 8], strides = [1, 1]} : vector<8x32xf32> to vector<8x8xf32>
    %20 = vector.extract_strided_slice %13 {offsets = [0, 0], sizes = [8, 8], strides = [1, 1]} : vector<8x32xf32> to vector<8x8xf32>
    %21 = vector.extract_strided_slice %18 {offsets = [0, 0], sizes = [8, 8], strides = [1, 1]} : vector<8x32xf32> to vector<8x8xf32>
    %cst_19 = arith.constant dense<0.000000e+00> : vector<8x8xf32>
    %22 = tpu.matmul %19, %20, %cst_19 {dimension_numbers = #tpu.dot_dimension_numbers<[1], [1], [0], [0], [0, 0, 1, 0], [], []>} : vector<8x8xf32>, vector<8x8xf32>, vector<8x8xf32> -> vector<8x8xf32>
    %cst_20 = arith.constant 0.353553385 : f32
    %23 = vector.broadcast %cst_20 : f32 to vector<8x8xf32>
    %24 = arith.mulf %22, %23 : vector<8x8xf32>
    %25 = vector.broadcast %3 : vector<1x8xf32> to vector<8x8xf32>
    %26 = arith.addf %24, %25 : vector<8x8xf32>
    %cst_21 = arith.constant dense<0xFF800000> : vector<8xf32>
    %27 = vector.multi_reduction <maximumf>, %26, %cst_21 [1] : vector<8x8xf32> to vector<8xf32>
    %28 = vector.shape_cast %27 : vector<8xf32> to vector<8x1xf32>
    %29 = vector.broadcast %28 : vector<8x1xf32> to vector<8x8xf32>
    %30 = arith.subf %26, %29 : vector<8x8xf32>
    %31 = math.exp %30 : vector<8x8xf32>
    %cst_22 = arith.constant dense<0.000000e+00> : vector<8xf32>
    %32 = vector.multi_reduction <add>, %31, %cst_22 [1] : vector<8x8xf32> to vector<8xf32>
    %33 = vector.shape_cast %32 : vector<8xf32> to vector<8x1xf32>
    %34 = vector.broadcast %33 : vector<8x1xf32> to vector<8x8xf32>
    %35 = arith.divf %31, %34 : vector<8x8xf32>
    %cst_23 = arith.constant dense<0.000000e+00> : vector<8x8xf32>
    %36 = tpu.matmul %35, %21, %cst_23 {dimension_numbers = #tpu.dot_dimension_numbers<[1], [0], [0], [1], [0, 0, 1, 1], [], []>} : vector<8x8xf32>, vector<8x8xf32>, vector<8x8xf32> -> vector<8x8xf32>
    %37 = vector.extract_strided_slice %8 {offsets = [0, 8], sizes = [8, 8], strides = [1, 1]} : vector<8x32xf32> to vector<8x8xf32>
    %38 = vector.extract_strided_slice %13 {offsets = [0, 8], sizes = [8, 8], strides = [1, 1]} : vector<8x32xf32> to vector<8x8xf32>
    %39 = vector.extract_strided_slice %18 {offsets = [0, 8], sizes = [8, 8], strides = [1, 1]} : vector<8x32xf32> to vector<8x8xf32>
    %cst_24 = arith.constant dense<0.000000e+00> : vector<8x8xf32>
    %40 = tpu.matmul %37, %38, %cst_24 {dimension_numbers = #tpu.dot_dimension_numbers<[1], [1], [0], [0], [0, 0, 1, 0], [], []>} : vector<8x8xf32>, vector<8x8xf32>, vector<8x8xf32> -> vector<8x8xf32>
    %cst_25 = arith.constant 0.353553385 : f32
    %41 = vector.broadcast %cst_25 : f32 to vector<8x8xf32>
    %42 = arith.mulf %40, %41 : vector<8x8xf32>
    %43 = vector.broadcast %3 : vector<1x8xf32> to vector<8x8xf32>
    %44 = arith.addf %42, %43 : vector<8x8xf32>
    %cst_26 = arith.constant dense<0xFF800000> : vector<8xf32>
    %45 = vector.multi_reduction <maximumf>, %44, %cst_26 [1] : vector<8x8xf32> to vector<8xf32>
    %46 = vector.shape_cast %45 : vector<8xf32> to vector<8x1xf32>
    %47 = vector.broadcast %46 : vector<8x1xf32> to vector<8x8xf32>
    %48 = arith.subf %44, %47 : vector<8x8xf32>
    %49 = math.exp %48 : vector<8x8xf32>
    %cst_27 = arith.constant dense<0.000000e+00> : vector<8xf32>
    %50 = vector.multi_reduction <add>, %49, %cst_27 [1] : vector<8x8xf32> to vector<8xf32>
    %51 = vector.shape_cast %50 : vector<8xf32> to vector<8x1xf32>
    %52 = vector.broadcast %51 : vector<8x1xf32> to vector<8x8xf32>
    %53 = arith.divf %49, %52 : vector<8x8xf32>
    %cst_28 = arith.constant dense<0.000000e+00> : vector<8x8xf32>
    %54 = tpu.matmul %53, %39, %cst_28 {dimension_numbers = #tpu.dot_dimension_numbers<[1], [0], [0], [1], [0, 0, 1, 1], [], []>} : vector<8x8xf32>, vector<8x8xf32>, vector<8x8xf32> -> vector<8x8xf32>
    %55 = vector.extract_strided_slice %8 {offsets = [0, 16], sizes = [8, 8], strides = [1, 1]} : vector<8x32xf32> to vector<8x8xf32>
    %56 = vector.extract_strided_slice %13 {offsets = [0, 16], sizes = [8, 8], strides = [1, 1]} : vector<8x32xf32> to vector<8x8xf32>
    %57 = vector.extract_strided_slice %18 {offsets = [0, 16], sizes = [8, 8], strides = [1, 1]} : vector<8x32xf32> to vector<8x8xf32>
    %cst_29 = arith.constant dense<0.000000e+00> : vector<8x8xf32>
    %58 = tpu.matmul %55, %56, %cst_29 {dimension_numbers = #tpu.dot_dimension_numbers<[1], [1], [0], [0], [0, 0, 1, 0], [], []>} : vector<8x8xf32>, vector<8x8xf32>, vector<8x8xf32> -> vector<8x8xf32>
    %cst_30 = arith.constant 0.353553385 : f32
    %59 = vector.broadcast %cst_30 : f32 to vector<8x8xf32>
    %60 = arith.mulf %58, %59 : vector<8x8xf32>
    %61 = vector.broadcast %3 : vector<1x8xf32> to vector<8x8xf32>
    %62 = arith.addf %60, %61 : vector<8x8xf32>
    %cst_31 = arith.constant dense<0xFF800000> : vector<8xf32>
    %63 = vector.multi_reduction <maximumf>, %62, %cst_31 [1] : vector<8x8xf32> to vector<8xf32>
    %64 = vector.shape_cast %63 : vector<8xf32> to vector<8x1xf32>
    %65 = vector.broadcast %64 : vector<8x1xf32> to vector<8x8xf32>
    %66 = arith.subf %62, %65 : vector<8x8xf32>
    %67 = math.exp %66 : vector<8x8xf32>
    %cst_32 = arith.constant dense<0.000000e+00> : vector<8xf32>
    %68 = vector.multi_reduction <add>, %67, %cst_32 [1] : vector<8x8xf32> to vector<8xf32>
    %69 = vector.shape_cast %68 : vector<8xf32> to vector<8x1xf32>
    %70 = vector.broadcast %69 : vector<8x1xf32> to vector<8x8xf32>
    %71 = arith.divf %67, %70 : vector<8x8xf32>
    %cst_33 = arith.constant dense<0.000000e+00> : vector<8x8xf32>
    %72 = tpu.matmul %71, %57, %cst_33 {dimension_numbers = #tpu.dot_dimension_numbers<[1], [0], [0], [1], [0, 0, 1, 1], [], []>} : vector<8x8xf32>, vector<8x8xf32>, vector<8x8xf32> -> vector<8x8xf32>
    %73 = vector.extract_strided_slice %8 {offsets = [0, 24], sizes = [8, 8], strides = [1, 1]} : vector<8x32xf32> to vector<8x8xf32>
    %74 = vector.extract_strided_slice %13 {offsets = [0, 24], sizes = [8, 8], strides = [1, 1]} : vector<8x32xf32> to vector<8x8xf32>
    %75 = vector.extract_strided_slice %18 {offsets = [0, 24], sizes = [8, 8], strides = [1, 1]} : vector<8x32xf32> to vector<8x8xf32>
    %cst_34 = arith.constant dense<0.000000e+00> : vector<8x8xf32>
    %76 = tpu.matmul %73, %74, %cst_34 {dimension_numbers = #tpu.dot_dimension_numbers<[1], [1], [0], [0], [0, 0, 1, 0], [], []>} : vector<8x8xf32>, vector<8x8xf32>, vector<8x8xf32> -> vector<8x8xf32>
    %cst_35 = arith.constant 0.353553385 : f32
    %77 = vector.broadcast %cst_35 : f32 to vector<8x8xf32>
    %78 = arith.mulf %76, %77 : vector<8x8xf32>
    %79 = vector.broadcast %3 : vector<1x8xf32> to vector<8x8xf32>
    %80 = arith.addf %78, %79 : vector<8x8xf32>
    %cst_36 = arith.constant dense<0xFF800000> : vector<8xf32>
    %81 = vector.multi_reduction <maximumf>, %80, %cst_36 [1] : vector<8x8xf32> to vector<8xf32>
    %82 = vector.shape_cast %81 : vector<8xf32> to vector<8x1xf32>
    %83 = vector.broadcast %82 : vector<8x1xf32> to vector<8x8xf32>
    %84 = arith.subf %80, %83 : vector<8x8xf32>
    %85 = math.exp %84 : vector<8x8xf32>
    %cst_37 = arith.constant dense<0.000000e+00> : vector<8xf32>
    %86 = vector.multi_reduction <add>, %85, %cst_37 [1] : vector<8x8xf32> to vector<8xf32>
    %87 = vector.shape_cast %86 : vector<8xf32> to vector<8x1xf32>
    %88 = vector.broadcast %87 : vector<8x1xf32> to vector<8x8xf32>
    %89 = arith.divf %85, %88 : vector<8x8xf32>
    %cst_38 = arith.constant dense<0.000000e+00> : vector<8x8xf32>
    %90 = tpu.matmul %89, %75, %cst_38 {dimension_numbers = #tpu.dot_dimension_numbers<[1], [0], [0], [1], [0, 0, 1, 1], [], []>} : vector<8x8xf32>, vector<8x8xf32>, vector<8x8xf32> -> vector<8x8xf32>
    %91 = tpu.concatenate %36, %54, %72, %90 in 1 : vector<8x8xf32>, vector<8x8xf32>, vector<8x8xf32>, vector<8x8xf32> -> vector<8x32xf32>
    %c0_39 = arith.constant 0 : index
    %c0_40 = arith.constant 0 : index
    %c0_41 = arith.constant 0 : index
    %92 = vector.load %arg9[%c0_39, %c0_40, %c0_41] : memref<1x8x32xf32, #tpu.memory_space<vmem>>, vector<1x8x32xf32>
    %93 = vector.shape_cast %92 : vector<1x8x32xf32> to vector<8x32xf32>
    %94 = vector.shape_cast %91 : vector<8x32xf32> to vector<1x8x32xf32>
    tpu.vector_store %arg9[%c0_39, %c0_40, %c0_41], %94 {strides = array<i32>} : memref<1x8x32xf32, #tpu.memory_space<vmem>>, vector<1x8x32xf32>,
    return
  }
  func.func @transform_0(%arg0: i32) -> (i32, i32, i32) {
    %c0_i32 = arith.constant 0 : i32
    %c0_i32_0 = arith.constant 0 : i32
    %c0_i32_1 = arith.constant 0 : i32
    return %arg0, %c0_i32, %c0_i32_0 : i32, i32, i32
  }
  func.func @transform_1(%arg0: i32) -> (i32, i32) {
    %c0_i32 = arith.constant 0 : i32
    %c0_i32_0 = arith.constant 0 : i32
    %c0_i32_1 = arith.constant 0 : i32
    return %c0_i32, %c0_i32_0 : i32, i32
  }
  func.func @transform_2(%arg0: i32) -> (i32, i32) {
    %c0_i32 = arith.constant 0 : i32
    %c0_i32_0 = arith.constant 0 : i32
    %c0_i32_1 = arith.constant 0 : i32
    return %c0_i32, %c0_i32_0 : i32, i32
  }
  func.func @transform_3(%arg0: i32) -> (i32, i32) {
    %c0_i32 = arith.constant 0 : i32
    %c0_i32_0 = arith.constant 0 : i32
    %c0_i32_1 = arith.constant 0 : i32
    return %c0_i32, %c0_i32_0 : i32, i32
  }
  func.func @transform_4(%arg0: i32) -> (i32, i32) {
    %c0_i32 = arith.constant 0 : i32
    %c0_i32_0 = arith.constant 0 : i32
    %c0_i32_1 = arith.constant 0 : i32
    return %c0_i32, %c0_i32_0 : i32, i32
  }
  func.func @transform_5(%arg0: i32) -> (i32, i32) {
    %c0_i32 = arith.constant 0 : i32
    %c0_i32_0 = arith.constant 0 : i32
    %c0_i32_1 = arith.constant 0 : i32
    return %c0_i32, %c0_i32_0 : i32, i32
  }
  func.func @transform_6(%arg0: i32) -> (i32, i32) {
    %c0_i32 = arith.constant 0 : i32
    %c0_i32_0 = arith.constant 0 : i32
    %c0_i32_1 = arith.constant 0 : i32
    return %c0_i32, %c0_i32_0 : i32, i32
  }
  func.func @transform_7(%arg0: i32) -> (i32, i32, i32) {
    %c0_i32 = arith.constant 0 : i32
    %c0_i32_0 = arith.constant 0 : i32
    %c0_i32_1 = arith.constant 0 : i32
    return %arg0, %c0_i32, %c0_i32_0 : i32, i32, i32
  }
  func.func @transform_8(%arg0: i32) -> (i32, i32, i32) {
    %c0_i32 = arith.constant 0 : i32
    %c0_i32_0 = arith.constant 0 : i32
    %c0_i32_1 = arith.constant 0 : i32
    return %arg0, %c0_i32, %c0_i32_0 : i32, i32, i32
  }
}

</mosaic_0001>

<llo_original>
// kernel: tpu_custom_call.1
$region0: #{tpu_custom_call.1}
  #allocation0 [shape = 'u32[]', space=smem, size = 0x4, offset = 0x4, fixed_abs, tag = 'smem constant byte address 0x4 - core index']
  #allocation1 [shape = 'u32[144,128]{1,0:T(1,128)}', space=vmem, size = 0x12000, scoped, tag = 'internal scratch']
  %s0 = inlined_call_operand.hbm [shape: f32[2,8,32], index: 0, kind: input, shape index: {}]
  %s1 = inlined_call_operand.hbm [shape: f32[32,32], index: 1, kind: input, shape index: {}]
  %s2 = inlined_call_operand.hbm [shape: f32[32,32], index: 2, kind: input, shape index: {}]
  %s3 = inlined_call_operand.hbm [shape: f32[32,32], index: 3, kind: input, shape index: {}]
  %s4 = inlined_call_operand.vmem [shape: f32[1,32], index: 4, kind: input, shape index: {}]
  %s5 = inlined_call_operand.vmem [shape: f32[1,32], index: 5, kind: input, shape index: {}]
  %s6 = inlined_call_operand.vmem [shape: f32[1,32], index: 6, kind: input, shape index: {}]
  %s7 = inlined_call_operand.vmem [shape: f32[2,1,8], index: 7, kind: input, shape index: {}]
  %s8 = inlined_call_operand.hbm [shape: f32[2,8,32], index: 8, kind: output, shape index: {}]
  %s9 = sld [smem:[#allocation0]]
  $region81: #{tpu_custom_call.1} parent=0
    _
  %s11 = ssub.s32 1, %s9
  %s12 = scalar_select 0, %s11, %s9
  $region1: #{tpu_custom_call.1} parent=0
    #allocation2 [shape = 'u8[8192]{0}', space=vmem, size = 0x2000, scoped, tag = 'input window, operand 0']
    #allocation3 [shape = 's32[2]{0}', space=sflag, size = 0x8, scoped, tag = 'scoped memory for tpu_custom_call.1']
    #allocation4 [shape = 's32[2]{0}', space=sflag, size = 0x8, scoped, tag = 'scoped memory for tpu_custom_call.1']
    #allocation5 [shape = 'u8[16384]{0}', space=vmem, size = 0x4000, scoped, tag = 'input window, operand 1, single buffered']
    #allocation6 [shape = 's32[1]{0}', space=sflag, size = 0x4, scoped, tag = 'scoped memory for tpu_custom_call.1']
    #allocation7 [shape = 'u8[16384]{0}', space=vmem, size = 0x4000, scoped, tag = 'input window, operand 2, single buffered']
    #allocation8 [shape = 'u8[16384]{0}', space=vmem, size = 0x4000, scoped, tag = 'input window, operand 3, single buffered']
    #allocation9 [shape = 's32[1]{0}', space=sflag, size = 0x4, scoped, tag = 'scoped memory for tpu_custom_call.1']
    #allocation10 [shape = 'u8[8192]{0}', space=vmem, size = 0x2000, scoped, tag = 'output window, operand 0']
    %13 = vsyncpa [#allocation3], 0
    %s14 = scalar_lea.sflag [#allocation3], 1
    %15 = vsyncpa %s14, 0
    %16 = vsyncpa [#allocation6], 0
    %17 = vsyncpa [#allocation9], 0
    %18 = vsyncpa [#allocation4], 0
    %s19 = scalar_lea.sflag [#allocation4], 1
    %20 = vsyncpa %s19, 0
    loop: start=0, step=1, limit=4
    $region2: #{tpu_custom_call.1} parent=1 // loop_pre_header
      _
    $region3: #{tpu_custom_call.1} parent=1 // loop_header
      %s22 = sphi 0, %s26
      %p23 = scmp.ge.s32.totalorder %s22, 4
      %s32 = sphi 0, %s34
      %s35 = sphi 0, %s32
      %s36 = sphi 0, %s35
      %s52 = sphi 0, %s36
      %s56 = sphi 0, %s56
      %s58 = sphi 0, %s56
      %s59 = sphi 0, %s58
      %s73 = sphi 0, %s59
      %s77 = sphi 0, %s77
      %s79 = sphi 0, %s77
      %s80 = sphi 0, %s79
      %s94 = sphi 0, %s80
      %s98 = sphi 0, %s98
      %s100 = sphi 0, %s98
      %s101 = sphi 0, %s100
      %s115 = sphi 0, %s101
      %s119 = sphi 0, %s119
      %s121 = sphi 0, %s119
      %s122 = sphi 0, %s121
      %s136 = sphi 0, %s122
      %s140 = sphi 0, %s140
      %s142 = sphi 0, %s140
      %s143 = sphi 0, %s142
      %s157 = sphi 0, %s143
      %s161 = sphi 0, %s161
      %s163 = sphi 0, %s161
      %s164 = sphi 0, %s163
      %s178 = sphi 0, %s164
      %s184 = sphi 0, %s186
      %s187 = sphi 0, %s184
      %s188 = sphi 0, %s187
      %s204 = sphi 0, %s188
      %s210 = sphi 0, %s212
      %s213 = sphi 0, %s210
      %s214 = sphi 0, %s213
      %s230 = sphi 0, %s214
    $region4: #{tpu_custom_call.1} parent=1 // loop_header_branch
      %25 = sbr.rel (%p23) target = $region8
    $region5: #{tpu_custom_call.1} parent=1 // loop_body
      %s27 = ssub.s32 %s22, 1
      %s28 = ssub.s32 %s22, 2
      %s29 = sadd.s32 %s22, 1
      %s30 = ssub.s32 %s22, %s29
      %p31 = scmp.eq.s32.totalorder %s30, 0
      %s33 = sadd.s32 %s32, 1
      %s34 = scalar_select %p31, %s32, %s33
      %p37 = pneg %p31
      %p38 = scmp.eq.s32.totalorder %s22, 1
      %p39 = por %p37, %p38
      %p40 = scmp.ne.s32.totalorder %s32, %s35
      %p41 = scmp.eq.s32.totalorder %s22, 0
      %p42 = por %p40, %p41
      %p43 = scmp.ne.s32.totalorder %s32, %s35
      %p44 = scmp.eq.s32.totalorder %s27, 1
      %p45 = por %p43, %p44
      %p46 = scmp.ne.s32.totalorder %s35, %s36
      %p47 = scmp.eq.s32.totalorder %s27, 0
      %p48 = por %p46, %p47
      %p49 = scmp.ne.s32.totalorder %s35, %s36
      %p50 = scmp.eq.s32.totalorder %s28, 1
      %p51 = por %p49, %p50
      %p53 = scmp.ne.s32.totalorder %s36, %s52
      %p54 = scmp.eq.s32.totalorder %s28, 0
      %p55 = por %p53, %p54
      %s57 = sadd.s32 %s56, 1
      %p60 = scmp.eq.s32.totalorder %s22, 1
      %p61 = scmp.ne.s32.totalorder %s56, %s58
      %p62 = scmp.eq.s32.totalorder %s22, 0
      %p63 = por %p61, %p62
      %p64 = scmp.ne.s32.totalorder %s56, %s58
      %p65 = scmp.eq.s32.totalorder %s27, 1
      %p66 = por %p64, %p65
      %p67 = scmp.ne.s32.totalorder %s58, %s59
      %p68 = scmp.eq.s32.totalorder %s27, 0
      %p69 = por %p67, %p68
      %p70 = scmp.ne.s32.totalorder %s58, %s59
      %p71 = scmp.eq.s32.totalorder %s28, 1
      %p72 = por %p70, %p71
      %p74 = scmp.ne.s32.totalorder %s59, %s73
      %p75 = scmp.eq.s32.totalorder %s28, 0
      %p76 = por %p74, %p75
      %s78 = sadd.s32 %s77, 1
      %p81 = scmp.eq.s32.totalorder %s22, 1
      %p82 = scmp.ne.s32.totalorder %s77, %s79
      %p83 = scmp.eq.s32.totalorder %s22, 0
      %p84 = por %p82, %p83
      %p85 = scmp.ne.s32.totalorder %s77, %s79
      %p86 = scmp.eq.s32.totalorder %s27, 1
      %p87 = por %p85, %p86
      %p88 = scmp.ne.s32.totalorder %s79, %s80
      %p89 = scmp.eq.s32.totalorder %s27, 0
      %p90 = por %p88, %p89
      %p91 = scmp.ne.s32.totalorder %s79, %s80
      %p92 = scmp.eq.s32.totalorder %s28, 1
      %p93 = por %p91, %p92
      %p95 = scmp.ne.s32.totalorder %s80, %s94
      %p96 = scmp.eq.s32.totalorder %s28, 0
      %p97 = por %p95, %p96
      %s99 = sadd.s32 %s98, 1
      %p102 = scmp.eq.s32.totalorder %s22, 1
      %p103 = scmp.ne.s32.totalorder %s98, %s100
      %p104 = scmp.eq.s32.totalorder %s22, 0
      %p105 = por %p103, %p104
      %p106 = scmp.ne.s32.totalorder %s98, %s100
      %p107 = scmp.eq.s32.totalorder %s27, 1
      %p108 = por %p106, %p107
      %p109 = scmp.ne.s32.totalorder %s100, %s101
      %p110 = scmp.eq.s32.totalorder %s27, 0
      %p111 = por %p109, %p110
      %p112 = scmp.ne.s32.totalorder %s100, %s101
      %p113 = scmp.eq.s32.totalorder %s28, 1
      %p114 = por %p112, %p113
      %p116 = scmp.ne.s32.totalorder %s101, %s115
      %p117 = scmp.eq.s32.totalorder %s28, 0
      %p118 = por %p116, %p117
      %s120 = sadd.s32 %s119, 1
      %p123 = scmp.eq.s32.totalorder %s22, 1
      %p124 = scmp.ne.s32.totalorder %s119, %s121
      %p125 = scmp.eq.s32.totalorder %s22, 0
      %p126 = por %p124, %p125
      %p127 = scmp.ne.s32.totalorder %s119, %s121
      %p128 = scmp.eq.s32.totalorder %s27, 1
      %p129 = por %p127, %p128
      %p130 = scmp.ne.s32.totalorder %s121, %s122
      %p131 = scmp.eq.s32.totalorder %s27, 0
      %p132 = por %p130, %p131
      %p133 = scmp.ne.s32.totalorder %s121, %s122
      %p134 = scmp.eq.s32.totalorder %s28, 1
      %p135 = por %p133, %p134
      %p137 = scmp.ne.s32.totalorder %s122, %s136
      %p138 = scmp.eq.s32.totalorder %s28, 0
      %p139 = por %p137, %p138
      %s141 = sadd.s32 %s140, 1
      %p144 = scmp.eq.s32.totalorder %s22, 1
      %p145 = scmp.ne.s32.totalorder %s140, %s142
      %p146 = scmp.eq.s32.totalorder %s22, 0
      %p147 = por %p145, %p146
      %p148 = scmp.ne.s32.totalorder %s140, %s142
      %p149 = scmp.eq.s32.totalorder %s27, 1
      %p150 = por %p148, %p149
      %p151 = scmp.ne.s32.totalorder %s142, %s143
      %p152 = scmp.eq.s32.totalorder %s27, 0
      %p153 = por %p151, %p152
      %p154 = scmp.ne.s32.totalorder %s142, %s143
      %p155 = scmp.eq.s32.totalorder %s28, 1
      %p156 = por %p154, %p155
      %p158 = scmp.ne.s32.totalorder %s143, %s157
      %p159 = scmp.eq.s32.totalorder %s28, 0
      %p160 = por %p158, %p159
      %s162 = sadd.s32 %s161, 1
      %p165 = scmp.eq.s32.totalorder %s22, 1
      %p166 = scmp.ne.s32.totalorder %s161, %s163
      %p167 = scmp.eq.s32.totalorder %s22, 0
      %p168 = por %p166, %p167
      %p169 = scmp.ne.s32.totalorder %s161, %s163
      %p170 = scmp.eq.s32.totalorder %s27, 1
      %p171 = por %p169, %p170
      %p172 = scmp.ne.s32.totalorder %s163, %s164
      %p173 = scmp.eq.s32.totalorder %s27, 0
      %p174 = por %p172, %p173
      %p175 = scmp.ne.s32.totalorder %s163, %s164
      %p176 = scmp.eq.s32.totalorder %s28, 1
      %p177 = por %p175, %p176
      %p179 = scmp.ne.s32.totalorder %s164, %s178
      %p180 = scmp.eq.s32.totalorder %s28, 0
      %p181 = por %p179, %p180
      %s182 = ssub.s32 %s22, %s29
      %p183 = scmp.eq.s32.totalorder %s182, 0
      %s185 = sadd.s32 %s184, 1
      %s186 = scalar_select %p183, %s184, %s185
      %p189 = pneg %p183
      %p190 = scmp.eq.s32.totalorder %s22, 1
      %p191 = por %p189, %p190
      %p192 = scmp.ne.s32.totalorder %s184, %s187
      %p193 = scmp.eq.s32.totalorder %s22, 0
      %p194 = por %p192, %p193
      %p195 = scmp.ne.s32.totalorder %s184, %s187
      %p196 = scmp.eq.s32.totalorder %s27, 1
      %p197 = por %p195, %p196
      %p198 = scmp.ne.s32.totalorder %s187, %s188
      %p199 = scmp.eq.s32.totalorder %s27, 0
      %p200 = por %p198, %p199
      %p201 = scmp.ne.s32.totalorder %s187, %s188
      %p202 = scmp.eq.s32.totalorder %s28, 1
      %p203 = por %p201, %p202
      %p205 = scmp.ne.s32.totalorder %s188, %s204
      %p206 = scmp.eq.s32.totalorder %s28, 0
      %p207 = por %p205, %p206
      %s208 = ssub.s32 %s22, %s29
      %p209 = scmp.eq.s32.totalorder %s208, 0
      %s211 = sadd.s32 %s210, 1
      %s212 = scalar_select %p209, %s210, %s211
      %p215 = pneg %p209
      %p216 = scmp.eq.s32.totalorder %s22, 1
      %p217 = por %p215, %p216
      %p218 = scmp.ne.s32.totalorder %s210, %s213
      %p219 = scmp.eq.s32.totalorder %s22, 0
      %p220 = por %p218, %p219
      %p221 = scmp.ne.s32.totalorder %s210, %s213
      %p222 = scmp.eq.s32.totalorder %s27, 1
      %p223 = por %p221, %p222
      %p224 = scmp.ne.s32.totalorder %s213, %s214
      %p225 = scmp.eq.s32.totalorder %s27, 0
      %p226 = por %p224, %p225
      %p227 = scmp.ne.s32.totalorder %s213, %s214
      %p228 = scmp.eq.s32.totalorder %s28, 1
      %p229 = por %p227, %p228
      %p231 = scmp.ne.s32.totalorder %s214, %s230
      %p232 = scmp.eq.s32.totalorder %s28, 0
      %p233 = por %p231, %p232
      %p234 = scmp.le.s32.totalorder 1, %s22
      %p235 = scmp.lt.s32.totalorder %s22, 3
      %p236 = pnand %p234, %p235
      %p237 = pneg %p236
      // Predicated region
      $region9: #{tpu_custom_call.1} parent=5 // pred_check
        _
      $region10: #{tpu_custom_call.1} parent=5 // pred_check_branch
        %239 = sbr.rel (%p236) target = $region12
      $region11: #{tpu_custom_call.1} parent=5 // pred_region
        %s240 = ssub.s32 %s22, 1
        // Predicated region
        $region13: #{tpu_custom_call.1} parent=11 // pred_check
          %p241 = pneg %p69
        $region14: #{tpu_custom_call.1} parent=11 // pred_check_branch
          %243 = sbr.rel (%p241) target = $region16
        $region15: #{tpu_custom_call.1} parent=11 // pred_region
          %s245 = ssub.s32 512, 512
          %246 = vsyncadd [#allocation6], %s245
          %s247 = sshll.u32 [#allocation5], 4
          %s248 = int_to_ptr.vmem [resolvable:$true] %s247
          %253 = dma.hbm_to_vmem [thread:$0]  %s1, 512, %s248, [#allocation6], 128, 128, 8
        $region16: #{tpu_custom_call.1} parent=11 // pred_fallthru
          _
        // Predicated region
        $region17: #{tpu_custom_call.1} parent=11 // pred_check
          %p254 = pneg %p90
        $region18: #{tpu_custom_call.1} parent=11 // pred_check_branch
          %256 = sbr.rel (%p254) target = $region20
        $region19: #{tpu_custom_call.1} parent=11 // pred_region
          %s258 = ssub.s32 512, 512
          %259 = vsyncadd [#allocation6], %s258
          %s260 = sshll.u32 [#allocation7], 4
          %s261 = int_to_ptr.vmem [resolvable:$true] %s260
          %266 = dma.hbm_to_vmem [thread:$0]  %s2, 512, %s261, [#allocation6], 128, 128, 8
        $region20: #{tpu_custom_call.1} parent=11 // pred_fallthru
          _
        // Predicated region
        $region21: #{tpu_custom_call.1} parent=11 // pred_check
          %p267 = pneg %p111
        $region22: #{tpu_custom_call.1} parent=11 // pred_check_branch
          %269 = sbr.rel (%p267) target = $region24
        $region23: #{tpu_custom_call.1} parent=11 // pred_region
          %s271 = ssub.s32 512, 512
          %272 = vsyncadd [#allocation9], %s271
          %s273 = sshll.u32 [#allocation8], 4
          %s274 = int_to_ptr.vmem [resolvable:$true] %s273
          %279 = dma.hbm_to_vmem [thread:$0]  %s3, 512, %s274, [#allocation9], 128, 128, 8
        $region24: #{tpu_custom_call.1} parent=11 // pred_fallthru
          _
        // Predicated region
        $region25: #{tpu_custom_call.1} parent=11 // pred_check
          %p280 = pneg %p132
        $region26: #{tpu_custom_call.1} parent=11 // pred_check_branch
          %282 = sbr.rel (%p280) target = $region28
        $region27: #{tpu_custom_call.1} parent=11 // pred_region
          _
        $region28: #{tpu_custom_call.1} parent=11 // pred_fallthru
          _
        // Predicated region
        $region29: #{tpu_custom_call.1} parent=11 // pred_check
          %p283 = pneg %p153
        $region30: #{tpu_custom_call.1} parent=11 // pred_check_branch
          %285 = sbr.rel (%p283) target = $region32
        $region31: #{tpu_custom_call.1} parent=11 // pred_region
          _
        $region32: #{tpu_custom_call.1} parent=11 // pred_fallthru
          _
        // Predicated region
        $region33: #{tpu_custom_call.1} parent=11 // pred_check
          %p286 = pneg %p174
        $region34: #{tpu_custom_call.1} parent=11 // pred_check_branch
          %288 = sbr.rel (%p286) target = $region36
        $region35: #{tpu_custom_call.1} parent=11 // pred_region
          _
        $region36: #{tpu_custom_call.1} parent=11 // pred_fallthru
          _
      $region12: #{tpu_custom_call.1} parent=5 // pred_fallthru
        _
      %p289 = scmp.lt.s32.totalorder %s22, 2
      // Predicated region
      $region37: #{tpu_custom_call.1} parent=5 // pred_check
        %p290 = pneg %p289
      $region38: #{tpu_custom_call.1} parent=5 // pred_check_branch
        %292 = sbr.rel (%p290) target = $region40
      $region39: #{tpu_custom_call.1} parent=5 // pred_region
        // Predicated region
        $region41: #{tpu_custom_call.1} parent=39 // pred_check
          %p293 = pneg %p42
        $region42: #{tpu_custom_call.1} parent=39 // pred_check_branch
          %295 = sbr.rel (%p293) target = $region44
        $region43: #{tpu_custom_call.1} parent=39 // pred_region
          %s296 = sand.u32 %s32, 1
          %s297 = scalar_lea.sflag [#allocation3], %s296
          %s298 = sand.u32 %s32, 1
          %s299 = smul.addr %s298, 8
          %s300 = scalar_lea.vmem [#allocation2], %s299
          %s302 = ssub.s32 128, 128
          %303 = vsyncadd %s297, %s302
          %s304 = smul.addr %s22, 128
          %s305 = scalar_lea.hbm %s0, %s304
          %s307 = sshll.u32 %s300, 4
          %s308 = int_to_ptr.vmem [resolvable:$true] %s307
          %310 = dma.hbm_to_vmem [thread:$0]  %s305, 128, %s308, %s297
        $region44: #{tpu_custom_call.1} parent=39 // pred_fallthru
          _
        // Predicated region
        $region45: #{tpu_custom_call.1} parent=39 // pred_check
          %p311 = pneg %p194
        $region46: #{tpu_custom_call.1} parent=39 // pred_check_branch
          %313 = sbr.rel (%p311) target = $region48
        $region47: #{tpu_custom_call.1} parent=39 // pred_region
          %p314 = scmp.lt.s32.totalorder %s22, 1
          %s315 = scalar_select %p314, %s22, 1
          %s316 = scalar_lea.vmem %s7, %s315
        $region48: #{tpu_custom_call.1} parent=39 // pred_fallthru
          _
      $region40: #{tpu_custom_call.1} parent=5 // pred_fallthru
        _
      %p317 = scmp.le.s32.totalorder 1, %s22
      %p318 = scmp.lt.s32.totalorder %s22, 3
      %p319 = pnand %p317, %p318
      %p320 = pneg %p319
      // Predicated region
      $region49: #{tpu_custom_call.1} parent=5 // pred_check
        _
      $region50: #{tpu_custom_call.1} parent=5 // pred_check_branch
        %322 = sbr.rel (%p319) target = $region52
      $region51: #{tpu_custom_call.1} parent=5 // pred_region
        %s323 = ssub.s32 %s22, 1
        %s324 = sand.u32 %s35, 1
        %s325 = scalar_lea.sflag [#allocation3], %s324
        %s326 = sand.u32 %s35, 1
        %s327 = smul.addr %s326, 8
        %s328 = scalar_lea.vmem [#allocation2], %s327
        // Predicated region
        $region53: #{tpu_custom_call.1} parent=51 // pred_check
          %p329 = pneg %p48
        $region54: #{tpu_custom_call.1} parent=51 // pred_check_branch
          %331 = sbr.rel (%p329) target = $region56
        $region55: #{tpu_custom_call.1} parent=51 // pred_region
          %332 = dma.done %s325, 128
        $region56: #{tpu_custom_call.1} parent=51 // pred_fallthru
          _
        // Predicated region
        $region57: #{tpu_custom_call.1} parent=51 // pred_check
          %p333 = pneg %p69
        $region58: #{tpu_custom_call.1} parent=51 // pred_check_branch
          %335 = sbr.rel (%p333) target = $region60
        $region59: #{tpu_custom_call.1} parent=51 // pred_region
          %336 = dma.done [#allocation6], 512
        $region60: #{tpu_custom_call.1} parent=51 // pred_fallthru
          _
        // Predicated region
        $region61: #{tpu_custom_call.1} parent=51 // pred_check
          %p337 = pneg %p90
        $region62: #{tpu_custom_call.1} parent=51 // pred_check_branch
          %339 = sbr.rel (%p337) target = $region64
        $region63: #{tpu_custom_call.1} parent=51 // pred_region
          %340 = dma.done [#allocation6], 512
        $region64: #{tpu_custom_call.1} parent=51 // pred_fallthru
          _
        // Predicated region
        $region65: #{tpu_custom_call.1} parent=51 // pred_check
          %p341 = pneg %p111
        $region66: #{tpu_custom_call.1} parent=51 // pred_check_branch
          %343 = sbr.rel (%p341) target = $region68
        $region67: #{tpu_custom_call.1} parent=51 // pred_region
          %344 = dma.done [#allocation9], 512
        $region68: #{tpu_custom_call.1} parent=51 // pred_fallthru
          _
        %s345 = sand.u32 %s35, 1
        %s346 = scalar_lea.sflag [#allocation3], %s345
        %s347 = sand.u32 %s35, 1
        %s348 = smul.addr %s347, 8
        %s349 = scalar_lea.vmem [#allocation2], %s348
        %p350 = pneg %p48
        %p351 = pneg %p45
        %p352 = pneg %p69
        %p353 = pneg %p66
        %p354 = pneg %p90
        %p355 = pneg %p87
        %p356 = pneg %p111
        %p357 = pneg %p108
        %p358 = pneg %p132
        %p359 = pneg %p129
        %p360 = pneg %p153
        %p361 = pneg %p150
        %p362 = pneg %p174
        %p363 = pneg %p171
        %p364 = scmp.lt.s32.totalorder %s27, 1
        %s365 = scalar_select %p364, %s27, 1
        %s366 = scalar_lea.vmem %s7, %s365
        %p367 = pneg %p200
        %p368 = pneg %p197
        %p369 = pneg %p226
        %p370 = pneg %p223
        %s371 = sand.u32 %s213, 1
        %s372 = scalar_lea.sflag [#allocation4], %s371
        %s373 = sand.u32 %s213, 1
        %s374 = smul.addr %s373, 8
        %s375 = scalar_lea.vmem [#allocation10], %s374
        %p376 = scmp.lt.s32.totalorder %s27, 1
        %s377 = scalar_select %p376, %s27, 1
        %s378 = scalar_lea.vmem %s7, %s377
        %v379 = vld [vmem:[%s328] sm:$0xff]
        %v380 = vld [vmem:[%s378] sm:$0x1]
        %v381 = vld [vmem:[#allocation5] sm:$0xff]
        %v382 = vld [vmem:[#allocation5 + $0x8] sm:$0xff]
        %v383 = vld [vmem:[#allocation5 + $0x10] sm:$0xff]
        %v384 = vld [vmem:[#allocation5 + $0x18] sm:$0xff]
        %v385 = vld [vmem:[%s4] sm:$0x1]
        %v387 = vlaneseq
        %v388 = vshrl.u32 %v387, 7
        %v389 = vsub.s32 0, %v388
        %v390 = vrot.slane %v385, %v389
        %vm392 = vcmask 261120
        %v394 = vsel %vm392, %v379, 0
        %396 = vmatprep.subr.mxu0 0.0
        %397 = vmatpush1.msra.mxu0 %v381
        %398 = vmatprep.subr.mxu0 0.0
        %399 = vmatpush1.msra.mxu0 %v382
        %400 = vmatprep.subr.mxu0 0.0
        %401 = vmatpush1.msra.mxu0 %v383
        %402 = vmatprep.subr.mxu0 0.0
        %403 = vmatpush1.msra.mxu0 %v384
        %404 = vmatprep.subr.mxu0 0.0
        %405 = vmatpush1.msra.mxu0 0.0
        %406 = vmatprep.subr.mxu0 0.0
        %407 = vmatpush1.msra.mxu0 0.0
        %408 = vmatprep.subr.mxu0 0.0
        %409 = vmatpush1.msra.mxu0 0.0
        %410 = vmatprep.subr.mxu0 0.0
        %411 = vmatpush1.msra.mxu0 0.0
        %412 = vmatprep.subr.mxu0 0.0
        %413 = vmatpush1.msra.mxu0 0.0
        %414 = vmatprep.subr.mxu0 0.0
        %415 = vmatpush1.msra.mxu0 0.0
        %416 = vmatprep.subr.mxu0 0.0
        %417 = vmatpush1.msra.mxu0 0.0
        %418 = vmatprep.subr.mxu0 0.0
        %419 = vmatpush1.msra.mxu0 0.0
        %420 = vmatprep.subr.mxu0 0.0
        %421 = vmatpush1.msra.mxu0 0.0
        %422 = vmatprep.subr.mxu0 0.0
        %423 = vmatpush1.msra.mxu0 0.0
        %424 = vmatprep.subr.mxu0 0.0
        %425 = vmatpush1.msra.mxu0 0.0
        %426 = vmatprep.subr.mxu0 0.0
        %427 = vmatpush1.msra.mxu0 0.0
        %428 = vmatprep.subr.mxu0 0.0
        %429 = vmatpush1.msra.mxu0 0.0
        %430 = vmatprep.subr.mxu0 0.0
        %431 = vmatpush1.msra.mxu0 0.0
        %432 = vmatprep.subr.mxu0 0.0
        %433 = vmatpush1.msra.mxu0 0.0
        %434 = vmatprep.subr.mxu0 0.0
        %435 = vmatpush1.msra.mxu0 0.0
        %436 = vmatprep.subr.mxu0 0.0
        %437 = vmatpush1.msra.mxu0 0.0
        %438 = vmatprep.subr.mxu0 0.0
        %439 = vmatpush1.msra.mxu0 0.0
        %440 = vmatprep.subr.mxu0 0.0
        %441 = vmatpush1.msra.mxu0 0.0
        %442 = vmatprep.subr.mxu0 0.0
        %443 = vmatpush1.msra.mxu0 0.0
        %444 = vmatprep.subr.mxu0 0.0
        %445 = vmatpush1.msra.mxu0 0.0
        %446 = vmatprep.subr.mxu0 0.0
        %447 = vmatpush1.msra.mxu0 0.0
        %448 = vmatprep.subr.mxu0 0.0
        %449 = vmatpush1.msra.mxu0 0.0
        %450 = vmatprep.subr.mxu0 0.0
        %451 = vmatpush1.msra.mxu0 0.0
        %452 = vmatprep.subr.mxu0 0.0
        %453 = vmatpush1.msra.mxu0 0.0
        %454 = vmatprep.subr.mxu0 0.0
        %455 = vmatpush1.msra.mxu0 0.0
        %456 = vmatprep.subr.mxu0 0.0
        %457 = vmatpush1.msra.mxu0 0.0
        %458 = vmatprep.subr.mxu0 0.0
        %459 = vmatpush1.msra.mxu0 0.0
        %460 = vmatprep.mubr.f32.mxu0 0.0
        %461 = vmatmul.mubr.f32.gmra.mrb[0].mxu0 %v394
        %v462 = vpop.f32.mrb[0].mxu0
        %v463 = vadd.f32 %v390, %v462
        %v464 = vpop.f32.mrb[0].mxu0
        %465 = vdwg.mxu0
        %v466 = vld [vmem:[#allocation7] sm:$0xff]
        %v467 = vld [vmem:[#allocation7 + $0x8] sm:$0xff]
        %v468 = vld [vmem:[#allocation7 + $0x10] sm:$0xff]
        %v469 = vld [vmem:[#allocation7 + $0x18] sm:$0xff]
        %v470 = vld [vmem:[%s5] sm:$0x1]
        %v472 = vlaneseq
        %v473 = vshrl.u32 %v472, 7
        %v474 = vsub.s32 0, %v473
        %v475 = vrot.slane %v470, %v474
        %477 = vmatprep.subr.mxu0 0.0
        %478 = vmatpush1.msra.mxu0 %v466
        %479 = vmatprep.subr.mxu0 0.0
        %480 = vmatpush1.msra.mxu0 %v467
        %481 = vmatprep.subr.mxu0 0.0
        %482 = vmatpush1.msra.mxu0 %v468
        %483 = vmatprep.subr.mxu0 0.0
        %484 = vmatpush1.msra.mxu0 %v469
        %485 = vmatprep.subr.mxu0 0.0
        %486 = vmatpush1.msra.mxu0 0.0
        %487 = vmatprep.subr.mxu0 0.0
        %488 = vmatpush1.msra.mxu0 0.0
        %489 = vmatprep.subr.mxu0 0.0
        %490 = vmatpush1.msra.mxu0 0.0
        %491 = vmatprep.subr.mxu0 0.0
        %492 = vmatpush1.msra.mxu0 0.0
        %493 = vmatprep.subr.mxu0 0.0
        %494 = vmatpush1.msra.mxu0 0.0
        %495 = vmatprep.subr.mxu0 0.0
        %496 = vmatpush1.msra.mxu0 0.0
        %497 = vmatprep.subr.mxu0 0.0
        %498 = vmatpush1.msra.mxu0 0.0
        %499 = vmatprep.subr.mxu0 0.0
        %500 = vmatpush1.msra.mxu0 0.0
        %501 = vmatprep.subr.mxu0 0.0
        %502 = vmatpush1.msra.mxu0 0.0
        %503 = vmatprep.subr.mxu0 0.0
        %504 = vmatpush1.msra.mxu0 0.0
        %505 = vmatprep.subr.mxu0 0.0
        %506 = vmatpush1.msra.mxu0 0.0
        %507 = vmatprep.subr.mxu0 0.0
        %508 = vmatpush1.msra.mxu0 0.0
        %509 = vmatprep.subr.mxu0 0.0
        %510 = vmatpush1.msra.mxu0 0.0
        %511 = vmatprep.subr.mxu0 0.0
        %512 = vmatpush1.msra.mxu0 0.0
        %513 = vmatprep.subr.mxu0 0.0
        %514 = vmatpush1.msra.mxu0 0.0
        %515 = vmatprep.subr.mxu0 0.0
        %516 = vmatpush1.msra.mxu0 0.0
        %517 = vmatprep.subr.mxu0 0.0
        %518 = vmatpush1.msra.mxu0 0.0
        %519 = vmatprep.subr.mxu0 0.0
        %520 = vmatpush1.msra.mxu0 0.0
        %521 = vmatprep.subr.mxu0 0.0
        %522 = vmatpush1.msra.mxu0 0.0
        %523 = vmatprep.subr.mxu0 0.0
        %524 = vmatpush1.msra.mxu0 0.0
        %525 = vmatprep.subr.mxu0 0.0
        %526 = vmatpush1.msra.mxu0 0.0
        %527 = vmatprep.subr.mxu0 0.0
        %528 = vmatpush1.msra.mxu0 0.0
        %529 = vmatprep.subr.mxu0 0.0
        %530 = vmatpush1.msra.mxu0 0.0
        %531 = vmatprep.subr.mxu0 0.0
        %532 = vmatpush1.msra.mxu0 0.0
        %533 = vmatprep.subr.mxu0 0.0
        %534 = vmatpush1.msra.mxu0 0.0
        %535 = vmatprep.subr.mxu0 0.0
        %536 = vmatpush1.msra.mxu0 0.0
        %537 = vmatprep.subr.mxu0 0.0
        %538 = vmatpush1.msra.mxu0 0.0
        %539 = vmatprep.subr.mxu0 0.0
        %540 = vmatpush1.msra.mxu0 0.0
        %541 = vmatprep.mubr.f32.mxu0 0.0
        %542 = vmatmul.mubr.f32.gmra.mrb[0].mxu0 %v394
        %v543 = vpop.f32.mrb[0].mxu0
        %v544 = vadd.f32 %v475, %v543
        %v545 = vpop.f32.mrb[0].mxu0
        %546 = vdwg.mxu0
        %v547 = vld [vmem:[#allocation8] sm:$0xff]
        %v548 = vld [vmem:[#allocation8 + $0x8] sm:$0xff]
        %v549 = vld [vmem:[#allocation8 + $0x10] sm:$0xff]
        %v550 = vld [vmem:[#allocation8 + $0x18] sm:$0xff]
        %v551 = vld [vmem:[%s6] sm:$0x1]
        %v553 = vlaneseq
        %v554 = vshrl.u32 %v553, 7
        %v555 = vsub.s32 0, %v554
        %v556 = vrot.slane %v551, %v555
        %558 = vmatprep.subr.mxu0 0.0
        %559 = vmatpush1.msra.mxu0 %v547
        %560 = vmatprep.subr.mxu0 0.0
        %561 = vmatpush1.msra.mxu0 %v548
        %562 = vmatprep.subr.mxu0 0.0
        %563 = vmatpush1.msra.mxu0 %v549
        %564 = vmatprep.subr.mxu0 0.0
        %565 = vmatpush1.msra.mxu0 %v550
        %566 = vmatprep.subr.mxu0 0.0
        %567 = vmatpush1.msra.mxu0 0.0
        %568 = vmatprep.subr.mxu0 0.0
        %569 = vmatpush1.msra.mxu0 0.0
        %570 = vmatprep.subr.mxu0 0.0
        %571 = vmatpush1.msra.mxu0 0.0
        %572 = vmatprep.subr.mxu0 0.0
        %573 = vmatpush1.msra.mxu0 0.0
        %574 = vmatprep.subr.mxu0 0.0
        %575 = vmatpush1.msra.mxu0 0.0
        %576 = vmatprep.subr.mxu0 0.0
        %577 = vmatpush1.msra.mxu0 0.0
        %578 = vmatprep.subr.mxu0 0.0
        %579 = vmatpush1.msra.mxu0 0.0
        %580 = vmatprep.subr.mxu0 0.0
        %581 = vmatpush1.msra.mxu0 0.0
        %582 = vmatprep.subr.mxu0 0.0
        %583 = vmatpush1.msra.mxu0 0.0
        %584 = vmatprep.subr.mxu0 0.0
        %585 = vmatpush1.msra.mxu0 0.0
        %586 = vmatprep.subr.mxu0 0.0
        %587 = vmatpush1.msra.mxu0 0.0
        %588 = vmatprep.subr.mxu0 0.0
        %589 = vmatpush1.msra.mxu0 0.0
        %590 = vmatprep.subr.mxu0 0.0
        %591 = vmatpush1.msra.mxu0 0.0
        %592 = vmatprep.subr.mxu0 0.0
        %593 = vmatpush1.msra.mxu0 0.0
        %594 = vmatprep.subr.mxu0 0.0
        %595 = vmatpush1.msra.mxu0 0.0
        %596 = vmatprep.subr.mxu0 0.0
        %597 = vmatpush1.msra.mxu0 0.0
        %598 = vmatprep.subr.mxu0 0.0
        %599 = vmatpush1.msra.mxu0 0.0
        %600 = vmatprep.subr.mxu0 0.0
        %601 = vmatpush1.msra.mxu0 0.0
        %602 = vmatprep.subr.mxu0 0.0
        %603 = vmatpush1.msra.mxu0 0.0
        %604 = vmatprep.subr.mxu0 0.0
        %605 = vmatpush1.msra.mxu0 0.0
        %606 = vmatprep.subr.mxu0 0.0
        %607 = vmatpush1.msra.mxu0 0.0
        %608 = vmatprep.subr.mxu0 0.0
        %609 = vmatpush1.msra.mxu0 0.0
        %610 = vmatprep.subr.mxu0 0.0
        %611 = vmatpush1.msra.mxu0 0.0
        %612 = vmatprep.subr.mxu0 0.0
        %613 = vmatpush1.msra.mxu0 0.0
        %614 = vmatprep.subr.mxu0 0.0
        %615 = vmatpush1.msra.mxu0 0.0
        %616 = vmatprep.subr.mxu0 0.0
        %617 = vmatpush1.msra.mxu0 0.0
        %618 = vmatprep.subr.mxu0 0.0
        %619 = vmatpush1.msra.mxu0 0.0
        %620 = vmatprep.subr.mxu0 0.0
        %621 = vmatpush1.msra.mxu0 0.0
        %622 = vmatprep.mubr.f32.mxu0 0.0
        %623 = vmatmul.mubr.f32.gmra.mrb[0].mxu0 %v394
        %v624 = vpop.f32.mrb[0].mxu0
        %v625 = vadd.f32 %v556, %v624
        %v626 = vpop.f32.mrb[0].mxu0
        %627 = vdwg.mxu0
        %vm628 = vcmask 64512
        %v630 = vsel %vm628, %v463, 0
        %v633 = vsel %vm628, %v544, 0
        %635 = vmatprep.subr.mxu0 0.0
        %636 = vmatpush1.xpose.msra.mxu0 %v633
        %637 = vmatprep.subr.mxu0 0.0
        %638 = vmatpush1.xpose.msra.mxu0 0.0
        %639 = vmatprep.subr.mxu0 0.0
        %640 = vmatpush1.xpose.msra.mxu0 0.0
        %641 = vmatprep.subr.mxu0 0.0
        %642 = vmatpush1.xpose.msra.mxu0 0.0
        %643 = vmatprep.subr.mxu0 0.0
        %644 = vmatpush1.xpose.msra.mxu0 0.0
        %645 = vmatprep.subr.mxu0 0.0
        %646 = vmatpush1.xpose.msra.mxu0 0.0
        %647 = vmatprep.subr.mxu0 0.0
        %648 = vmatpush1.xpose.msra.mxu0 0.0
        %649 = vmatprep.subr.mxu0 0.0
        %650 = vmatpush1.xpose.msra.mxu0 0.0
        %651 = vmatprep.subr.mxu0 0.0
        %652 = vmatpush1.xpose.msra.mxu0 0.0
        %653 = vmatprep.subr.mxu0 0.0
        %654 = vmatpush1.xpose.msra.mxu0 0.0
        %655 = vmatprep.subr.mxu0 0.0
        %656 = vmatpush1.xpose.msra.mxu0 0.0
        %657 = vmatprep.subr.mxu0 0.0
        %658 = vmatpush1.xpose.msra.mxu0 0.0
        %659 = vmatprep.subr.mxu0 0.0
        %660 = vmatpush1.xpose.msra.mxu0 0.0
        %661 = vmatprep.subr.mxu0 0.0
        %662 = vmatpush1.xpose.msra.mxu0 0.0
        %663 = vmatprep.subr.mxu0 0.0
        %664 = vmatpush1.xpose.msra.mxu0 0.0
        %665 = vmatprep.subr.mxu0 0.0
        %666 = vmatpush1.xpose.msra.mxu0 0.0
        %667 = vmatprep.subr.mxu0 0.0
        %668 = vmatpush1.xpose.msra.mxu0 0.0
        %669 = vmatprep.subr.mxu0 0.0
        %670 = vmatpush1.xpose.msra.mxu0 0.0
        %671 = vmatprep.subr.mxu0 0.0
        %672 = vmatpush1.xpose.msra.mxu0 0.0
        %673 = vmatprep.subr.mxu0 0.0
        %674 = vmatpush1.xpose.msra.mxu0 0.0
        %675 = vmatprep.subr.mxu0 0.0
        %676 = vmatpush1.xpose.msra.mxu0 0.0
        %677 = vmatprep.subr.mxu0 0.0
        %678 = vmatpush1.xpose.msra.mxu0 0.0
        %679 = vmatprep.subr.mxu0 0.0
        %680 = vmatpush1.xpose.msra.mxu0 0.0
        %681 = vmatprep.subr.mxu0 0.0
        %682 = vmatpush1.xpose.msra.mxu0 0.0
        %683 = vmatprep.subr.mxu0 0.0
        %684 = vmatpush1.xpose.msra.mxu0 0.0
        %685 = vmatprep.subr.mxu0 0.0
        %686 = vmatpush1.xpose.msra.mxu0 0.0
        %687 = vmatprep.subr.mxu0 0.0
        %688 = vmatpush1.xpose.msra.mxu0 0.0
        %689 = vmatprep.subr.mxu0 0.0
        %690 = vmatpush1.xpose.msra.mxu0 0.0
        %691 = vmatprep.subr.mxu0 0.0
        %692 = vmatpush1.xpose.msra.mxu0 0.0
        %693 = vmatprep.subr.mxu0 0.0
        %694 = vmatpush1.xpose.msra.mxu0 0.0
        %695 = vmatprep.subr.mxu0 0.0
        %696 = vmatpush1.xpose.msra.mxu0 0.0
        %697 = vmatprep.subr.mxu0 0.0
        %698 = vmatpush1.xpose.msra.mxu0 0.0
        %699 = vmatprep.mubr.f32.mxu0 0.0
        %700 = vmatmul.mubr.f32.gmra.mrb[0].mxu0 %v630
        %v701 = vpop.f32.mrb[0].mxu0
        %v702 = vadd.f32 0.0, %v701
        %v703 = vpop.f32.mrb[0].mxu0
        %704 = vdwg.mxu0
        %v705 = vmul.f32 %v702, 0.35355338
        %v707 = vlaneseq
        %v708 = vshrl.u32 %v707, 7
        %v709 = vsub.s32 0, %v708
        %v710 = vrot.slane %v380, %v709
        %v712 = vadd.f32 %v705, %v710
        %v713 = vsel %vm628, %v712, -inf
        %714 = vmax.xlane.f32.xlu0 %v713
        %v715 = vpop.xlane.xlu0 %714
        %v716 = vsub.f32 %v712, %v715
        %v717 = vmul.f32 %v716, 1.442695
        %v718 = vpow.pop %v717
        %v719 = vsel %vm628, %v718, 0.0
        %720 = vadd.xlane.f32.xlu0 %v719
        %v721 = vpop.xlane.xlu0 %720
        %v722 = vrcp.pop %v721
        %v723 = vmul.f32 %v718, %v722
        %v725 = vsel %vm628, %v723, 0
        %727 = vmatprep.subr.mxu0 0.0
        %728 = vmatpush1.msra.mxu0 %v625
        %729 = vmatprep.subr.mxu0 0.0
        %730 = vmatpush1.msra.mxu0 0.0
        %731 = vmatprep.subr.mxu0 0.0
        %732 = vmatpush1.msra.mxu0 0.0
        %733 = vmatprep.subr.mxu0 0.0
        %734 = vmatpush1.msra.mxu0 0.0
        %735 = vmatprep.subr.mxu0 0.0
        %736 = vmatpush1.msra.mxu0 0.0
        %737 = vmatprep.subr.mxu0 0.0
        %738 = vmatpush1.msra.mxu0 0.0
        %739 = vmatprep.subr.mxu0 0.0
        %740 = vmatpush1.msra.mxu0 0.0
        %741 = vmatprep.subr.mxu0 0.0
        %742 = vmatpush1.msra.mxu0 0.0
        %743 = vmatprep.subr.mxu0 0.0
        %744 = vmatpush1.msra.mxu0 0.0
        %745 = vmatprep.subr.mxu0 0.0
        %746 = vmatpush1.msra.mxu0 0.0
        %747 = vmatprep.subr.mxu0 0.0
        %748 = vmatpush1.msra.mxu0 0.0
        %749 = vmatprep.subr.mxu0 0.0
        %750 = vmatpush1.msra.mxu0 0.0
        %751 = vmatprep.subr.mxu0 0.0
        %752 = vmatpush1.msra.mxu0 0.0
        %753 = vmatprep.subr.mxu0 0.0
        %754 = vmatpush1.msra.mxu0 0.0
        %755 = vmatprep.subr.mxu0 0.0
        %756 = vmatpush1.msra.mxu0 0.0
        %757 = vmatprep.subr.mxu0 0.0
        %758 = vmatpush1.msra.mxu0 0.0
        %759 = vmatprep.subr.mxu0 0.0
        %760 = vmatpush1.msra.mxu0 0.0
        %761 = vmatprep.subr.mxu0 0.0
        %762 = vmatpush1.msra.mxu0 0.0
        %763 = vmatprep.subr.mxu0 0.0
        %764 = vmatpush1.msra.mxu0 0.0
        %765 = vmatprep.subr.mxu0 0.0
        %766 = vmatpush1.msra.mxu0 0.0
        %767 = vmatprep.subr.mxu0 0.0
        %768 = vmatpush1.msra.mxu0 0.0
        %769 = vmatprep.subr.mxu0 0.0
        %770 = vmatpush1.msra.mxu0 0.0
        %771 = vmatprep.subr.mxu0 0.0
        %772 = vmatpush1.msra.mxu0 0.0
        %773 = vmatprep.subr.mxu0 0.0
        %774 = vmatpush1.msra.mxu0 0.0
        %775 = vmatprep.subr.mxu0 0.0
        %776 = vmatpush1.msra.mxu0 0.0
        %777 = vmatprep.subr.mxu0 0.0
        %778 = vmatpush1.msra.mxu0 0.0
        %779 = vmatprep.subr.mxu0 0.0
        %780 = vmatpush1.msra.mxu0 0.0
        %781 = vmatprep.subr.mxu0 0.0
        %782 = vmatpush1.msra.mxu0 0.0
        %783 = vmatprep.subr.mxu0 0.0
        %784 = vmatpush1.msra.mxu0 0.0
        %785 = vmatprep.subr.mxu0 0.0
        %786 = vmatpush1.msra.mxu0 0.0
        %787 = vmatprep.subr.mxu0 0.0
        %788 = vmatpush1.msra.mxu0 0.0
        %789 = vmatprep.subr.mxu0 0.0
        %790 = vmatpush1.msra.mxu0 0.0
        %791 = vmatprep.mubr.f32.mxu0 0.0
        %792 = vmatmul.mubr.f32.gmra.mrb[0].mxu0 %v725
        %v793 = vpop.f32.mrb[0].mxu0
        %v794 = vadd.f32 0.0, %v793
        %v795 = vpop.f32.mrb[0].mxu0
        %796 = vdwg.mxu0
        %797 = vrot.lane.b32.xlu0 %v463, 120
        %v798 = vpop.permute.xlu0 %797
        %799 = vrot.lane.b32.xlu0 %v544, 120
        %v800 = vpop.permute.xlu0 %799
        %v801 = vsel %vm628, %v798, 0
        %v803 = vsel %vm628, %v800, 0
        %805 = vmatprep.subr.mxu0 0.0
        %806 = vmatpush1.xpose.msra.mxu0 %v803
        %807 = vmatprep.subr.mxu0 0.0
        %808 = vmatpush1.xpose.msra.mxu0 0.0
        %809 = vmatprep.subr.mxu0 0.0
        %810 = vmatpush1.xpose.msra.mxu0 0.0
        %811 = vmatprep.subr.mxu0 0.0
        %812 = vmatpush1.xpose.msra.mxu0 0.0
        %813 = vmatprep.subr.mxu0 0.0
        %814 = vmatpush1.xpose.msra.mxu0 0.0
        %815 = vmatprep.subr.mxu0 0.0
        %816 = vmatpush1.xpose.msra.mxu0 0.0
        %817 = vmatprep.subr.mxu0 0.0
        %818 = vmatpush1.xpose.msra.mxu0 0.0
        %819 = vmatprep.subr.mxu0 0.0
        %820 = vmatpush1.xpose.msra.mxu0 0.0
        %821 = vmatprep.subr.mxu0 0.0
        %822 = vmatpush1.xpose.msra.mxu0 0.0
        %823 = vmatprep.subr.mxu0 0.0
        %824 = vmatpush1.xpose.msra.mxu0 0.0
        %825 = vmatprep.subr.mxu0 0.0
        %826 = vmatpush1.xpose.msra.mxu0 0.0
        %827 = vmatprep.subr.mxu0 0.0
        %828 = vmatpush1.xpose.msra.mxu0 0.0
        %829 = vmatprep.subr.mxu0 0.0
        %830 = vmatpush1.xpose.msra.mxu0 0.0
        %831 = vmatprep.subr.mxu0 0.0
        %832 = vmatpush1.xpose.msra.mxu0 0.0
        %833 = vmatprep.subr.mxu0 0.0
        %834 = vmatpush1.xpose.msra.mxu0 0.0
        %835 = vmatprep.subr.mxu0 0.0
        %836 = vmatpush1.xpose.msra.mxu0 0.0
        %837 = vmatprep.subr.mxu0 0.0
        %838 = vmatpush1.xpose.msra.mxu0 0.0
        %839 = vmatprep.subr.mxu0 0.0
        %840 = vmatpush1.xpose.msra.mxu0 0.0
        %841 = vmatprep.subr.mxu0 0.0
        %842 = vmatpush1.xpose.msra.mxu0 0.0
        %843 = vmatprep.subr.mxu0 0.0
        %844 = vmatpush1.xpose.msra.mxu0 0.0
        %845 = vmatprep.subr.mxu0 0.0
        %846 = vmatpush1.xpose.msra.mxu0 0.0
        %847 = vmatprep.subr.mxu0 0.0
        %848 = vmatpush1.xpose.msra.mxu0 0.0
        %849 = vmatprep.subr.mxu0 0.0
        %850 = vmatpush1.xpose.msra.mxu0 0.0
        %851 = vmatprep.subr.mxu0 0.0
        %852 = vmatpush1.xpose.msra.mxu0 0.0
        %853 = vmatprep.subr.mxu0 0.0
        %854 = vmatpush1.xpose.msra.mxu0 0.0
        %855 = vmatprep.subr.mxu0 0.0
        %856 = vmatpush1.xpose.msra.mxu0 0.0
        %857 = vmatprep.subr.mxu0 0.0
        %858 = vmatpush1.xpose.msra.mxu0 0.0
        %859 = vmatprep.subr.mxu0 0.0
        %860 = vmatpush1.xpose.msra.mxu0 0.0
        %861 = vmatprep.subr.mxu0 0.0
        %862 = vmatpush1.xpose.msra.mxu0 0.0
        %863 = vmatprep.subr.mxu0 0.0
        %864 = vmatpush1.xpose.msra.mxu0 0.0
        %865 = vmatprep.subr.mxu0 0.0
        %866 = vmatpush1.xpose.msra.mxu0 0.0
        %867 = vmatprep.subr.mxu0 0.0
        %868 = vmatpush1.xpose.msra.mxu0 0.0
        %869 = vmatprep.mubr.f32.mxu0 0.0
        %870 = vmatmul.mubr.f32.gmra.mrb[0].mxu0 %v801
        %v871 = vpop.f32.mrb[0].mxu0
        %v872 = vadd.f32 0.0, %v871
        %v873 = vpop.f32.mrb[0].mxu0
        %874 = vdwg.mxu0
        %v875 = vmul.f32 %v872, 0.35355338
        %v876 = vadd.f32 %v875, %v710
        %v877 = vsel %vm628, %v876, -inf
        %878 = vmax.xlane.f32.xlu0 %v877
        %v879 = vpop.xlane.xlu0 %878
        %v880 = vsub.f32 %v876, %v879
        %v881 = vmul.f32 %v880, 1.442695
        %v882 = vpow.pop %v881
        %v883 = vsel %vm628, %v882, 0.0
        %884 = vadd.xlane.f32.xlu0 %v883
        %v885 = vpop.xlane.xlu0 %884
        %v886 = vrcp.pop %v885
        %v887 = vmul.f32 %v882, %v886
        %889 = vrot.lane.b32.xlu0 %v625, 120
        %v890 = vpop.permute.xlu0 %889
        %v893 = vsel %vm628, %v887, 0
        %895 = vmatprep.subr.mxu0 0.0
        %896 = vmatpush1.msra.mxu0 %v890
        %897 = vmatprep.subr.mxu0 0.0
        %898 = vmatpush1.msra.mxu0 0.0
        %899 = vmatprep.subr.mxu0 0.0
        %900 = vmatpush1.msra.mxu0 0.0
        %901 = vmatprep.subr.mxu0 0.0
        %902 = vmatpush1.msra.mxu0 0.0
        %903 = vmatprep.subr.mxu0 0.0
        %904 = vmatpush1.msra.mxu0 0.0
        %905 = vmatprep.subr.mxu0 0.0
        %906 = vmatpush1.msra.mxu0 0.0
        %907 = vmatprep.subr.mxu0 0.0
        %908 = vmatpush1.msra.mxu0 0.0
        %909 = vmatprep.subr.mxu0 0.0
        %910 = vmatpush1.msra.mxu0 0.0
        %911 = vmatprep.subr.mxu0 0.0
        %912 = vmatpush1.msra.mxu0 0.0
        %913 = vmatprep.subr.mxu0 0.0
        %914 = vmatpush1.msra.mxu0 0.0
        %915 = vmatprep.subr.mxu0 0.0
        %916 = vmatpush1.msra.mxu0 0.0
        %917 = vmatprep.subr.mxu0 0.0
        %918 = vmatpush1.msra.mxu0 0.0
        %919 = vmatprep.subr.mxu0 0.0
        %920 = vmatpush1.msra.mxu0 0.0
        %921 = vmatprep.subr.mxu0 0.0
        %922 = vmatpush1.msra.mxu0 0.0
        %923 = vmatprep.subr.mxu0 0.0
        %924 = vmatpush1.msra.mxu0 0.0
        %925 = vmatprep.subr.mxu0 0.0
        %926 = vmatpush1.msra.mxu0 0.0
        %927 = vmatprep.subr.mxu0 0.0
        %928 = vmatpush1.msra.mxu0 0.0
        %929 = vmatprep.subr.mxu0 0.0
        %930 = vmatpush1.msra.mxu0 0.0
        %931 = vmatprep.subr.mxu0 0.0
        %932 = vmatpush1.msra.mxu0 0.0
        %933 = vmatprep.subr.mxu0 0.0
        %934 = vmatpush1.msra.mxu0 0.0
        %935 = vmatprep.subr.mxu0 0.0
        %936 = vmatpush1.msra.mxu0 0.0
        %937 = vmatprep.subr.mxu0 0.0
        %938 = vmatpush1.msra.mxu0 0.0
        %939 = vmatprep.subr.mxu0 0.0
        %940 = vmatpush1.msra.mxu0 0.0
        %941 = vmatprep.subr.mxu0 0.0
        %942 = vmatpush1.msra.mxu0 0.0
        %943 = vmatprep.subr.mxu0 0.0
        %944 = vmatpush1.msra.mxu0 0.0
        %945 = vmatprep.subr.mxu0 0.0
        %946 = vmatpush1.msra.mxu0 0.0
        %947 = vmatprep.subr.mxu0 0.0
        %948 = vmatpush1.msra.mxu0 0.0
        %949 = vmatprep.subr.mxu0 0.0
        %950 = vmatpush1.msra.mxu0 0.0
        %951 = vmatprep.subr.mxu0 0.0
        %952 = vmatpush1.msra.mxu0 0.0
        %953 = vmatprep.subr.mxu0 0.0
        %954 = vmatpush1.msra.mxu0 0.0
        %955 = vmatprep.subr.mxu0 0.0
        %956 = vmatpush1.msra.mxu0 0.0
        %957 = vmatprep.subr.mxu0 0.0
        %958 = vmatpush1.msra.mxu0 0.0
        %959 = vmatprep.mubr.f32.mxu0 0.0
        %960 = vmatmul.mubr.f32.gmra.mrb[0].mxu0 %v893
        %v961 = vpop.f32.mrb[0].mxu0
        %v962 = vadd.f32 0.0, %v961
        %v963 = vpop.f32.mrb[0].mxu0
        %964 = vdwg.mxu0
        %965 = vrot.lane.b32.xlu0 %v463, 112
        %v966 = vpop.permute.xlu0 %965
        %967 = vrot.lane.b32.xlu0 %v544, 112
        %v968 = vpop.permute.xlu0 %967
        %v969 = vsel %vm628, %v966, 0
        %v971 = vsel %vm628, %v968, 0
        %973 = vmatprep.subr.mxu0 0.0
        %974 = vmatpush1.xpose.msra.mxu0 %v971
        %975 = vmatprep.subr.mxu0 0.0
        %976 = vmatpush1.xpose.msra.mxu0 0.0
        %977 = vmatprep.subr.mxu0 0.0
        %978 = vmatpush1.xpose.msra.mxu0 0.0
        %979 = vmatprep.subr.mxu0 0.0
        %980 = vmatpush1.xpose.msra.mxu0 0.0
        %981 = vmatprep.subr.mxu0 0.0
        %982 = vmatpush1.xpose.msra.mxu0 0.0
        %983 = vmatprep.subr.mxu0 0.0
        %984 = vmatpush1.xpose.msra.mxu0 0.0
        %985 = vmatprep.subr.mxu0 0.0
        %986 = vmatpush1.xpose.msra.mxu0 0.0
        %987 = vmatprep.subr.mxu0 0.0
        %988 = vmatpush1.xpose.msra.mxu0 0.0
        %989 = vmatprep.subr.mxu0 0.0
        %990 = vmatpush1.xpose.msra.mxu0 0.0
        %991 = vmatprep.subr.mxu0 0.0
        %992 = vmatpush1.xpose.msra.mxu0 0.0
        %993 = vmatprep.subr.mxu0 0.0
        %994 = vmatpush1.xpose.msra.mxu0 0.0
        %995 = vmatprep.subr.mxu0 0.0
        %996 = vmatpush1.xpose.msra.mxu0 0.0
        %997 = vmatprep.subr.mxu0 0.0
        %998 = vmatpush1.xpose.msra.mxu0 0.0
        %999 = vmatprep.subr.mxu0 0.0
        %1000 = vmatpush1.xpose.msra.mxu0 0.0
        %1001 = vmatprep.subr.mxu0 0.0
        %1002 = vmatpush1.xpose.msra.mxu0 0.0
        %1003 = vmatprep.subr.mxu0 0.0
        %1004 = vmatpush1.xpose.msra.mxu0 0.0
        %1005 = vmatprep.subr.mxu0 0.0
        %1006 = vmatpush1.xpose.msra.mxu0 0.0
        %1007 = vmatprep.subr.mxu0 0.0
        %1008 = vmatpush1.xpose.msra.mxu0 0.0
        %1009 = vmatprep.subr.mxu0 0.0
        %1010 = vmatpush1.xpose.msra.mxu0 0.0
        %1011 = vmatprep.subr.mxu0 0.0
        %1012 = vmatpush1.xpose.msra.mxu0 0.0
        %1013 = vmatprep.subr.mxu0 0.0
        %1014 = vmatpush1.xpose.msra.mxu0 0.0
        %1015 = vmatprep.subr.mxu0 0.0
        %1016 = vmatpush1.xpose.msra.mxu0 0.0
        %1017 = vmatprep.subr.mxu0 0.0
        %1018 = vmatpush1.xpose.msra.mxu0 0.0
        %1019 = vmatprep.subr.mxu0 0.0
        %1020 = vmatpush1.xpose.msra.mxu0 0.0
        %1021 = vmatprep.subr.mxu0 0.0
        %1022 = vmatpush1.xpose.msra.mxu0 0.0
        %1023 = vmatprep.subr.mxu0 0.0
        %1024 = vmatpush1.xpose.msra.mxu0 0.0
        %1025 = vmatprep.subr.mxu0 0.0
        %1026 = vmatpush1.xpose.msra.mxu0 0.0
        %1027 = vmatprep.subr.mxu0 0.0
        %1028 = vmatpush1.xpose.msra.mxu0 0.0
        %1029 = vmatprep.subr.mxu0 0.0
        %1030 = vmatpush1.xpose.msra.mxu0 0.0
        %1031 = vmatprep.subr.mxu0 0.0
        %1032 = vmatpush1.xpose.msra.mxu0 0.0
        %1033 = vmatprep.subr.mxu0 0.0
        %1034 = vmatpush1.xpose.msra.mxu0 0.0
        %1035 = vmatprep.subr.mxu0 0.0
        %1036 = vmatpush1.xpose.msra.mxu0 0.0
        %1037 = vmatprep.mubr.f32.mxu0 0.0
        %1038 = vmatmul.mubr.f32.gmra.mrb[0].mxu0 %v969
        %v1039 = vpop.f32.mrb[0].mxu0
        %v1040 = vadd.f32 0.0, %v1039
        %v1041 = vpop.f32.mrb[0].mxu0
        %1042 = vdwg.mxu0
        %v1043 = vmul.f32 %v1040, 0.35355338
        %v1044 = vadd.f32 %v1043, %v710
        %v1045 = vsel %vm628, %v1044, -inf
        %1046 = vmax.xlane.f32.xlu0 %v1045
        %v1047 = vpop.xlane.xlu0 %1046
        %v1048 = vsub.f32 %v1044, %v1047
        %v1049 = vmul.f32 %v1048, 1.442695
        %v1050 = vpow.pop %v1049
        %v1051 = vsel %vm628, %v1050, 0.0
        %1052 = vadd.xlane.f32.xlu0 %v1051
        %v1053 = vpop.xlane.xlu0 %1052
        %v1054 = vrcp.pop %v1053
        %v1055 = vmul.f32 %v1050, %v1054
        %1056 = vrot.lane.b32.xlu0 %v625, 112
        %v1057 = vpop.permute.xlu0 %1056
        %v1060 = vsel %vm628, %v1055, 0
        %1062 = vmatprep.subr.mxu0 0.0
        %1063 = vmatpush1.msra.mxu0 %v1057
        %1064 = vmatprep.subr.mxu0 0.0
        %1065 = vmatpush1.msra.mxu0 0.0
        %1066 = vmatprep.subr.mxu0 0.0
        %1067 = vmatpush1.msra.mxu0 0.0
        %1068 = vmatprep.subr.mxu0 0.0
        %1069 = vmatpush1.msra.mxu0 0.0
        %1070 = vmatprep.subr.mxu0 0.0
        %1071 = vmatpush1.msra.mxu0 0.0
        %1072 = vmatprep.subr.mxu0 0.0
        %1073 = vmatpush1.msra.mxu0 0.0
        %1074 = vmatprep.subr.mxu0 0.0
        %1075 = vmatpush1.msra.mxu0 0.0
        %1076 = vmatprep.subr.mxu0 0.0
        %1077 = vmatpush1.msra.mxu0 0.0
        %1078 = vmatprep.subr.mxu0 0.0
        %1079 = vmatpush1.msra.mxu0 0.0
        %1080 = vmatprep.subr.mxu0 0.0
        %1081 = vmatpush1.msra.mxu0 0.0
        %1082 = vmatprep.subr.mxu0 0.0
        %1083 = vmatpush1.msra.mxu0 0.0
        %1084 = vmatprep.subr.mxu0 0.0
        %1085 = vmatpush1.msra.mxu0 0.0
        %1086 = vmatprep.subr.mxu0 0.0
        %1087 = vmatpush1.msra.mxu0 0.0
        %1088 = vmatprep.subr.mxu0 0.0
        %1089 = vmatpush1.msra.mxu0 0.0
        %1090 = vmatprep.subr.mxu0 0.0
        %1091 = vmatpush1.msra.mxu0 0.0
        %1092 = vmatprep.subr.mxu0 0.0
        %1093 = vmatpush1.msra.mxu0 0.0
        %1094 = vmatprep.subr.mxu0 0.0
        %1095 = vmatpush1.msra.mxu0 0.0
        %1096 = vmatprep.subr.mxu0 0.0
        %1097 = vmatpush1.msra.mxu0 0.0
        %1098 = vmatprep.subr.mxu0 0.0
        %1099 = vmatpush1.msra.mxu0 0.0
        %1100 = vmatprep.subr.mxu0 0.0
        %1101 = vmatpush1.msra.mxu0 0.0
        %1102 = vmatprep.subr.mxu0 0.0
        %1103 = vmatpush1.msra.mxu0 0.0
        %1104 = vmatprep.subr.mxu0 0.0
        %1105 = vmatpush1.msra.mxu0 0.0
        %1106 = vmatprep.subr.mxu0 0.0
        %1107 = vmatpush1.msra.mxu0 0.0
        %1108 = vmatprep.subr.mxu0 0.0
        %1109 = vmatpush1.msra.mxu0 0.0
        %1110 = vmatprep.subr.mxu0 0.0
        %1111 = vmatpush1.msra.mxu0 0.0
        %1112 = vmatprep.subr.mxu0 0.0
        %1113 = vmatpush1.msra.mxu0 0.0
        %1114 = vmatprep.subr.mxu0 0.0
        %1115 = vmatpush1.msra.mxu0 0.0
        %1116 = vmatprep.subr.mxu0 0.0
        %1117 = vmatpush1.msra.mxu0 0.0
        %1118 = vmatprep.subr.mxu0 0.0
        %1119 = vmatpush1.msra.mxu0 0.0
        %1120 = vmatprep.subr.mxu0 0.0
        %1121 = vmatpush1.msra.mxu0 0.0
        %1122 = vmatprep.subr.mxu0 0.0
        %1123 = vmatpush1.msra.mxu0 0.0
        %1124 = vmatprep.subr.mxu0 0.0
        %1125 = vmatpush1.msra.mxu0 0.0
        %1126 = vmatprep.mubr.f32.mxu0 0.0
        %1127 = vmatmul.mubr.f32.gmra.mrb[0].mxu0 %v1060
        %v1128 = vpop.f32.mrb[0].mxu0
        %v1129 = vadd.f32 0.0, %v1128
        %v1130 = vpop.f32.mrb[0].mxu0
        %1131 = vdwg.mxu0
        %1132 = vrot.lane.b32.xlu0 %v463, 104
        %v1133 = vpop.permute.xlu0 %1132
        %1134 = vrot.lane.b32.xlu0 %v544, 104
        %v1135 = vpop.permute.xlu0 %1134
        %v1136 = vsel %vm628, %v1133, 0
        %v1138 = vsel %vm628, %v1135, 0
        %1140 = vmatprep.subr.mxu0 0.0
        %1141 = vmatpush1.xpose.msra.mxu0 %v1138
        %1142 = vmatprep.subr.mxu0 0.0
        %1143 = vmatpush1.xpose.msra.mxu0 0.0
        %1144 = vmatprep.subr.mxu0 0.0
        %1145 = vmatpush1.xpose.msra.mxu0 0.0
        %1146 = vmatprep.subr.mxu0 0.0
        %1147 = vmatpush1.xpose.msra.mxu0 0.0
        %1148 = vmatprep.subr.mxu0 0.0
        %1149 = vmatpush1.xpose.msra.mxu0 0.0
        %1150 = vmatprep.subr.mxu0 0.0
        %1151 = vmatpush1.xpose.msra.mxu0 0.0
        %1152 = vmatprep.subr.mxu0 0.0
        %1153 = vmatpush1.xpose.msra.mxu0 0.0
        %1154 = vmatprep.subr.mxu0 0.0
        %1155 = vmatpush1.xpose.msra.mxu0 0.0
        %1156 = vmatprep.subr.mxu0 0.0
        %1157 = vmatpush1.xpose.msra.mxu0 0.0
        %1158 = vmatprep.subr.mxu0 0.0
        %1159 = vmatpush1.xpose.msra.mxu0 0.0
        %1160 = vmatprep.subr.mxu0 0.0
        %1161 = vmatpush1.xpose.msra.mxu0 0.0
        %1162 = vmatprep.subr.mxu0 0.0
        %1163 = vmatpush1.xpose.msra.mxu0 0.0
        %1164 = vmatprep.subr.mxu0 0.0
        %1165 = vmatpush1.xpose.msra.mxu0 0.0
        %1166 = vmatprep.subr.mxu0 0.0
        %1167 = vmatpush1.xpose.msra.mxu0 0.0
        %1168 = vmatprep.subr.mxu0 0.0
        %1169 = vmatpush1.xpose.msra.mxu0 0.0
        %1170 = vmatprep.subr.mxu0 0.0
        %1171 = vmatpush1.xpose.msra.mxu0 0.0
        %1172 = vmatprep.subr.mxu0 0.0
        %1173 = vmatpush1.xpose.msra.mxu0 0.0
        %1174 = vmatprep.subr.mxu0 0.0
        %1175 = vmatpush1.xpose.msra.mxu0 0.0
        %1176 = vmatprep.subr.mxu0 0.0
        %1177 = vmatpush1.xpose.msra.mxu0 0.0
        %1178 = vmatprep.subr.mxu0 0.0
        %1179 = vmatpush1.xpose.msra.mxu0 0.0
        %1180 = vmatprep.subr.mxu0 0.0
        %1181 = vmatpush1.xpose.msra.mxu0 0.0
        %1182 = vmatprep.subr.mxu0 0.0
        %1183 = vmatpush1.xpose.msra.mxu0 0.0
        %1184 = vmatprep.subr.mxu0 0.0
        %1185 = vmatpush1.xpose.msra.mxu0 0.0
        %1186 = vmatprep.subr.mxu0 0.0
        %1187 = vmatpush1.xpose.msra.mxu0 0.0
        %1188 = vmatprep.subr.mxu0 0.0
        %1189 = vmatpush1.xpose.msra.mxu0 0.0
        %1190 = vmatprep.subr.mxu0 0.0
        %1191 = vmatpush1.xpose.msra.mxu0 0.0
        %1192 = vmatprep.subr.mxu0 0.0
        %1193 = vmatpush1.xpose.msra.mxu0 0.0
        %1194 = vmatprep.subr.mxu0 0.0
        %1195 = vmatpush1.xpose.msra.mxu0 0.0
        %1196 = vmatprep.subr.mxu0 0.0
        %1197 = vmatpush1.xpose.msra.mxu0 0.0
        %1198 = vmatprep.subr.mxu0 0.0
        %1199 = vmatpush1.xpose.msra.mxu0 0.0
        %1200 = vmatprep.subr.mxu0 0.0
        %1201 = vmatpush1.xpose.msra.mxu0 0.0
        %1202 = vmatprep.subr.mxu0 0.0
        %1203 = vmatpush1.xpose.msra.mxu0 0.0
        %1204 = vmatprep.mubr.f32.mxu0 0.0
        %1205 = vmatmul.mubr.f32.gmra.mrb[0].mxu0 %v1136
        %v1206 = vpop.f32.mrb[0].mxu0
        %v1207 = vadd.f32 0.0, %v1206
        %v1208 = vpop.f32.mrb[0].mxu0
        %1209 = vdwg.mxu0
        %v1210 = vmul.f32 %v1207, 0.35355338
        %v1211 = vadd.f32 %v1210, %v710
        %v1212 = vsel %vm628, %v1211, -inf
        %1213 = vmax.xlane.f32.xlu0 %v1212
        %v1214 = vpop.xlane.xlu0 %1213
        %v1215 = vsub.f32 %v1211, %v1214
        %v1216 = vmul.f32 %v1215, 1.442695
        %v1217 = vpow.pop %v1216
        %v1218 = vsel %vm628, %v1217, 0.0
        %1219 = vadd.xlane.f32.xlu0 %v1218
        %v1220 = vpop.xlane.xlu0 %1219
        %v1221 = vrcp.pop %v1220
        %v1222 = vmul.f32 %v1217, %v1221
        %1223 = vrot.lane.b32.xlu0 %v625, 104
        %v1224 = vpop.permute.xlu0 %1223
        %v1227 = vsel %vm628, %v1222, 0
        %1229 = vmatprep.subr.mxu0 0.0
        %1230 = vmatpush1.msra.mxu0 %v1224
        %1231 = vmatprep.subr.mxu0 0.0
        %1232 = vmatpush1.msra.mxu0 0.0
        %1233 = vmatprep.subr.mxu0 0.0
        %1234 = vmatpush1.msra.mxu0 0.0
        %1235 = vmatprep.subr.mxu0 0.0
        %1236 = vmatpush1.msra.mxu0 0.0
        %1237 = vmatprep.subr.mxu0 0.0
        %1238 = vmatpush1.msra.mxu0 0.0
        %1239 = vmatprep.subr.mxu0 0.0
        %1240 = vmatpush1.msra.mxu0 0.0
        %1241 = vmatprep.subr.mxu0 0.0
        %1242 = vmatpush1.msra.mxu0 0.0
        %1243 = vmatprep.subr.mxu0 0.0
        %1244 = vmatpush1.msra.mxu0 0.0
        %1245 = vmatprep.subr.mxu0 0.0
        %1246 = vmatpush1.msra.mxu0 0.0
        %1247 = vmatprep.subr.mxu0 0.0
        %1248 = vmatpush1.msra.mxu0 0.0
        %1249 = vmatprep.subr.mxu0 0.0
        %1250 = vmatpush1.msra.mxu0 0.0
        %1251 = vmatprep.subr.mxu0 0.0
        %1252 = vmatpush1.msra.mxu0 0.0
        %1253 = vmatprep.subr.mxu0 0.0
        %1254 = vmatpush1.msra.mxu0 0.0
        %1255 = vmatprep.subr.mxu0 0.0
        %1256 = vmatpush1.msra.mxu0 0.0
        %1257 = vmatprep.subr.mxu0 0.0
        %1258 = vmatpush1.msra.mxu0 0.0
        %1259 = vmatprep.subr.mxu0 0.0
        %1260 = vmatpush1.msra.mxu0 0.0
        %1261 = vmatprep.subr.mxu0 0.0
        %1262 = vmatpush1.msra.mxu0 0.0
        %1263 = vmatprep.subr.mxu0 0.0
        %1264 = vmatpush1.msra.mxu0 0.0
        %1265 = vmatprep.subr.mxu0 0.0
        %1266 = vmatpush1.msra.mxu0 0.0
        %1267 = vmatprep.subr.mxu0 0.0
        %1268 = vmatpush1.msra.mxu0 0.0
        %1269 = vmatprep.subr.mxu0 0.0
        %1270 = vmatpush1.msra.mxu0 0.0
        %1271 = vmatprep.subr.mxu0 0.0
        %1272 = vmatpush1.msra.mxu0 0.0
        %1273 = vmatprep.subr.mxu0 0.0
        %1274 = vmatpush1.msra.mxu0 0.0
        %1275 = vmatprep.subr.mxu0 0.0
        %1276 = vmatpush1.msra.mxu0 0.0
        %1277 = vmatprep.subr.mxu0 0.0
        %1278 = vmatpush1.msra.mxu0 0.0
        %1279 = vmatprep.subr.mxu0 0.0
        %1280 = vmatpush1.msra.mxu0 0.0
        %1281 = vmatprep.subr.mxu0 0.0
        %1282 = vmatpush1.msra.mxu0 0.0
        %1283 = vmatprep.subr.mxu0 0.0
        %1284 = vmatpush1.msra.mxu0 0.0
        %1285 = vmatprep.subr.mxu0 0.0
        %1286 = vmatpush1.msra.mxu0 0.0
        %1287 = vmatprep.subr.mxu0 0.0
        %1288 = vmatpush1.msra.mxu0 0.0
        %1289 = vmatprep.subr.mxu0 0.0
        %1290 = vmatpush1.msra.mxu0 0.0
        %1291 = vmatprep.subr.mxu0 0.0
        %1292 = vmatpush1.msra.mxu0 0.0
        %1293 = vmatprep.mubr.f32.mxu0 0.0
        %1294 = vmatmul.mubr.f32.gmra.mrb[0].mxu0 %v1227
        %v1295 = vpop.f32.mrb[0].mxu0
        %v1296 = vadd.f32 0.0, %v1295
        %v1297 = vpop.f32.mrb[0].mxu0
        %1298 = vdwg.mxu0
        %1300 = vrot.lane.b32.xlu0 %v962, 8
        %v1301 = vpop.permute.xlu0 %1300
        %1304 = vrot.lane.b32.xlu0 %v1129, 16
        %v1305 = vpop.permute.xlu0 %1304
        %1308 = vrot.lane.b32.xlu0 %v1296, 24
        %v1309 = vpop.permute.xlu0 %1308
        %v1311 = vsel %vm628, %v794, %v1301
        %vm1312 = vcmask 130048
        %v1313 = vsel %vm1312, %v1311, %v1305
        %vm1314 = vcmask 195584
        %v1315 = vsel %vm1314, %v1313, %v1309
        %1316 = vst.msk [vmem:[%s375] sm:$0xff] %vm392, %v1315
        %s1317 = sand.u32 %s213, 1
        %s1318 = scalar_lea.sflag [#allocation4], %s1317
        %s1319 = sand.u32 %s213, 1
        %s1320 = smul.addr %s1319, 8
        %s1321 = scalar_lea.vmem [#allocation10], %s1320
        // Predicated region
        $region69: #{tpu_custom_call.1} parent=51 // pred_check
          %p1322 = pneg %p223
        $region70: #{tpu_custom_call.1} parent=51 // pred_check_branch
          %1324 = sbr.rel (%p1322) target = $region72
        $region71: #{tpu_custom_call.1} parent=51 // pred_region
          %s1326 = ssub.s32 128, 128
          %1327 = vsyncadd %s1318, %s1326
          %s1328 = smul.addr %s27, 128
          %s1329 = scalar_lea.hbm %s8, %s1328
          %s1331 = sshll.u32 %s1321, 4
          %s1332 = int_to_ptr.vmem [resolvable:$true] %s1331
          %1334 = dma.vmem_to_hbm [thread:$0]  %s1332, 128, %s1329, %s1318
        $region72: #{tpu_custom_call.1} parent=51 // pred_fallthru
          _
      $region52: #{tpu_custom_call.1} parent=5 // pred_fallthru
        _
      %p1335 = scmp.le.s32.totalorder 2, %s22
      // Predicated region
      $region73: #{tpu_custom_call.1} parent=5 // pred_check
        %p1336 = pneg %p1335
      $region74: #{tpu_custom_call.1} parent=5 // pred_check_branch
        %1338 = sbr.rel (%p1336) target = $region76
      $region75: #{tpu_custom_call.1} parent=5 // pred_region
        %s1339 = ssub.s32 %s22, 2
        // Predicated region
        $region77: #{tpu_custom_call.1} parent=75 // pred_check
          %p1340 = pneg %p229
        $region78: #{tpu_custom_call.1} parent=75 // pred_check_branch
          %1342 = sbr.rel (%p1340) target = $region80
        $region79: #{tpu_custom_call.1} parent=75 // pred_region
          %s1343 = sand.u32 %s214, 1
          %s1344 = scalar_lea.sflag [#allocation4], %s1343
          %s1345 = sand.u32 %s214, 1
          %s1346 = smul.addr %s1345, 8
          %s1347 = scalar_lea.vmem [#allocation10], %s1346
          %1348 = dma.done %s1344, 128
        $region80: #{tpu_custom_call.1} parent=75 // pred_fallthru
          _
      $region76: #{tpu_custom_call.1} parent=5 // pred_fallthru
        _
    $region6: #{tpu_custom_call.1} parent=1 // loop_footer
      %s26 = sadd.s32 1, %s22
    $region7: #{tpu_custom_call.1} parent=1 // loop_footer_branch
      %21 = sbr.rel target = $region3
    $region8: #{tpu_custom_call.1} parent=1 // loop_exit
      _
    %1349 = vsyncpa [#allocation3], 1
    %s1350 = scalar_lea.sflag [#allocation3], 1
    %1351 = vsyncpa %s1350, 1
    %1352 = vsyncpa [#allocation6], 1
    %1353 = vsyncpa [#allocation9], 1
    %1354 = vsyncpa [#allocation4], 1
    %s1355 = scalar_lea.sflag [#allocation4], 1
    %1356 = vsyncpa %s1355, 1

</llo_original>
